<compile_context>
chip_gen: v5e
topology: v5e:2x2
jax: 0.10.0
libtpu: 0.0.40
codegen_flags: <defaults>
</compile_context>

<pallas_src>
import numpy as np
import jax
import jax.numpy as jnp
from jax import lax
from jax.experimental import pallas as pl
from jax.experimental.pallas import tpu as pltpu


# ------------------------------------------------------------------ kernel ---
def _make_head_kernel(hw_true, hw_pad, c8):
    inv_hw = float(1.0 / hw_true)
    needs_mask = hw_pad != hw_true

    def head_kernel(x_ref, wqk_ref, bqk_ref, wv_ref, bv_ref, gamma_ref,
                    w1_ref, b1_ref, w2_ref, b2_ref, out_ref):
        bt, hw, c = x_ref.shape                       # hw == hw_pad
        x = x_ref[...]                                # (bt, hw_pad, C)  bf16
        x2d = x.reshape(bt * hw, c)                   # free: hw_pad % 16 == 0

        # Fused q|k 1x1-conv projections: one fat (bt*hw, C) bf16 MXU pass,
        # f32 accumulate.
        qk = jnp.dot(x2d, wqk_ref[...],
                     preferred_element_type=jnp.float32) + bqk_ref[...]
        q = qk[:, :c8].reshape(bt, hw, c8)            # (bt, hw_pad, C8)  f32
        k = qk[:, c8:].reshape(bt, hw, c8)

        # energy[b,i,j] = <q_i, k_j> — last-dim contraction, no transpose copy.
        energy = jnp.einsum("bic,bjc->bij", q, k,
                            preferred_element_type=jnp.float32)  # (bt, hw, hw)

        if needs_mask:  # padded key columns must not receive softmax mass
            col = lax.broadcasted_iota(jnp.int32, (hw_pad, hw_pad), 1)
            energy = jnp.where((col < hw_true)[None], energy, -1e30)

        # softmax over keys (nn.Softmax(dim=-1)), max-stabilized, f32.
        energy = energy - jnp.max(energy, axis=-1, keepdims=True)
        p = jnp.exp(energy)
        inv = pl.reciprocal(jnp.sum(p, axis=-1, keepdims=True), approx=True)
        attn = p * inv                                # (bt, hw_pad, hw_pad)

        # Only the spatial mean of (gamma*out + x) is consumed downstream:
        #   mean_i out[i,:] = (mean_i attn[i,:]) @ V = (attn_mean @ x) @ Wv + bv
        # (rows of attn sum to 1, so bv passes through exactly once).
        if needs_mask:  # padded query rows must not contribute to the mean
            row = lax.broadcasted_iota(jnp.int32, (hw_pad, hw_pad), 0)
            attn = jnp.where((row < hw_true)[None], attn, 0.0)
        attn_mean = jnp.sum(attn, axis=1) * inv_hw    # (bt, hw_pad)  f32

        # z = attn_mean @ x  — per-use bf16->f32 promotion, no standing f32 x copy.
        z = jnp.sum(attn_mean[:, :, None] * x, axis=1)               # (bt, C) f32
        zv = jnp.dot(z.astype(jnp.bfloat16), wv_ref[...],
                     preferred_element_type=jnp.float32) + bv_ref[...]
        # AdaptiveAvgPool2d(1) of the residual path (padded rows are zero).
        x_mean = jnp.sum(x, axis=1, dtype=jnp.float32) * inv_hw      # (bt, C) f32

        gamma = gamma_ref[0]                          # scalar from SMEM
        pooled = gamma * zv + x_mean                  # (bt, C)  f32

        # fc1 -> ReLU -> (Dropout = identity at inference) -> fc2 -> Sigmoid
        h = jnp.dot(pooled.astype(jnp.bfloat16), w1_ref[...],
                    preferred_element_type=jnp.float32) + b1_ref[...]
        h = jnp.maximum(h, 0.0)
        logit = jnp.dot(h.astype(jnp.bfloat16), w2_ref[...],
                        preferred_element_type=jnp.float32) + b2_ref[...]  # (bt, 1)
        out_ref[...] = jax.nn.sigmoid(logit).reshape(1, 1, bt)   # lane-dense block

    return head_kernel


# ----------------------------------------------------------------- wrapper ---
def custom_attention_head(x_nchw, params, block_b=None):
    """x_nchw: (B, C, H, W) feature map (output of the ResNet50 backbone)."""
    b, c, h, w = x_nchw.shape
    hw = h * w
    # Pad HW to the bf16 sublane tile so in-kernel reshapes are layout no-ops.
    hw_pad = ((hw + 15) // 16) * 16

    # NCHW -> (B, HW, C): channels on the 128-lane axis; bf16 activations.
    x = jnp.transpose(x_nchw.reshape(b, c, hw), (0, 2, 1)).astype(jnp.bfloat16)
    if hw_pad != hw:
        x = jnp.pad(x, ((0, 0), (0, hw_pad - hw), (0, 0)))

    # BT: batch elements per grid step.  Target ~256 MXU rows (BT*HW_pad) per
    # step, keep >= 2 steps, and make the step count EVEN for v7x's 2 TCs.
    if block_b is None:
        block_b = max(1, 256 // hw_pad)
    bt = max(1, min(block_b, b))
    if b > 1:
        bt = min(bt, -(-b // 2))          # at least 2 grid steps
    nb = -(-b // bt)
    if nb > 1 and nb % 2:
        nb += 1                            # even number of steps (v7x megacore)
        bt = -(-b // nb)                   # shrink BT instead of padding a block
    b_pad = nb * bt
    if b_pad != b:
        x = jnp.pad(x, ((0, b_pad - b), (0, 0), (0, 0)))

    wq, bq, wk, bk, wv, bv, gamma, w1, b1, w2, b2 = params
    c8 = wq.shape[1]
    cast = lambda a: a.astype(jnp.bfloat16)
    wqk_b = cast(jnp.concatenate([wq, wk], axis=1))   # fused q|k projection (C, 2*C8)
    bqk = jnp.concatenate([bq, bk], axis=1)           # (1, 2*C8) f32
    wv_b, w1_b, w2_b = cast(wv), cast(w1), cast(w2)
    gamma1 = gamma.reshape(1).astype(jnp.float32)     # (1,) SMEM scalar

    # Constant-index weights/biases: resident across the grid, single-buffered
    # (no double-buffer VMEM waste — matters at the real C=2048).
    w_spec = lambda arr: pl.BlockSpec(arr.shape, lambda i: (0, 0),
                                      pipeline_mode=pl.Buffered(1))

    kernel = _make_head_kernel(hw, hw_pad, c8)
    out = pl.pallas_call(
        kernel,
        out_shape=jax.ShapeDtypeStruct((nb, 1, bt), jnp.float32),
        grid=(nb,),
        in_specs=[
            pl.BlockSpec((bt, hw_pad, c), lambda i: (i, 0, 0)),  # BT samples / step
            w_spec(wqk_b), w_spec(bqk),
            w_spec(wv_b), w_spec(bv),
            pl.BlockSpec(memory_space=pltpu.MemorySpace.SMEM),    # gamma scalar
            w_spec(w1_b), w_spec(b1),
            w_spec(w2_b), w_spec(b2),
        ],
        out_specs=pl.BlockSpec((1, 1, bt), lambda i: (i, 0, 0)),
        compiler_params=pltpu.CompilerParams(
            dimension_semantics=("parallel",),
            # Single-buffered weights keep 32 MiB sufficient even at C=2048
            # (safe on v7x's 64 MiB physical VMEM; v5e/v6e could go higher).
            vmem_limit_bytes=32 * 1024 * 1024),
    )(x, wqk_b, bqk, wv_b, bv, gamma1, w1_b, b1, w2_b, b2)

    return out.reshape(b_pad, 1)[:b]      # matches nn.Linear(..,1) + Sigmoid


# --------------------------------------------------------------- reference ---
def reference_head(x_nchw, params):
    wq, bq, wk, bk, wv, bv, gamma, w1, b1, w2, b2 = params
    b, c, h, w = x_nchw.shape
    hw = h * w
    x = jnp.transpose(x_nchw.reshape(b, c, hw), (0, 2, 1))          # (B, HW, C) f32
    q = x @ wq + bq
    k = x @ wk + bk
    v = x @ wv + bv
    energy = jnp.einsum("bic,bjc->bij", q, k)
    attn = jax.nn.softmax(energy, axis=-1)
    out = jnp.einsum("bij,bjc->bic", attn, v)
    y = gamma[0] * out + x
    pooled = jnp.mean(y, axis=1)                                     # (B, C)
    hid = jnp.maximum(pooled @ w1 + b1, 0.0)
    return jax.nn.sigmoid(hid @ w2 + b2)                             # (B, 1)


# ------------------------------------------------------------------ params ---
def make_params(key, c, hid):
    c8 = c // 8
    ks = jax.random.split(key, 8)
    scale = 0.02
    wq = scale * jax.random.normal(ks[0], (c, c8), jnp.float32)   # Conv2d(C, C//8, 1) W^T
    bq = scale * jax.random.normal(ks[1], (1, c8), jnp.float32)
    wk = scale * jax.random.normal(ks[2], (c, c8), jnp.float32)
    bk = scale * jax.random.normal(ks[3], (1, c8), jnp.float32)
    wv = scale * jax.random.normal(ks[4], (c, c), jnp.float32)    # Conv2d(C, C, 1) W^T
    bv = scale * jax.random.normal(ks[5], (1, c), jnp.float32)
    # nn.Parameter(torch.zeros(1)) initializes gamma to 0; use a nonzero value
    # so the attention path is actually exercised numerically.
    gamma = jnp.full((1,), 0.5, jnp.float32)
    w1 = scale * jax.random.normal(ks[6], (c, hid), jnp.float32)  # Linear(C, HID) W^T
    b1 = jnp.zeros((1, hid), jnp.float32)
    w2 = scale * jax.random.normal(ks[7], (hid, 1), jnp.float32)  # Linear(HID, 1) W^T
    b2 = jnp.zeros((1, 1), jnp.float32)
    return (wq, bq, wk, bk, wv, bv, gamma, w1, b1, w2, b2)


# --------------------------------------------------------------------- main --
if __name__ == "__main__":
    key = jax.random.PRNGKey(0)
    k_x1, k_x2, k_p = jax.random.split(key, 3)

    C, HID = 256, 128            # real model: C=2048, HID=512 (kernel is shape-generic)
    params = make_params(k_p, C, HID)

    # Case 1: real ResNet50 spatial layout H=W=3 (HW=9): exercises the HW 9->16
    # sublane padding + softmax/pool masking path.  B=8 -> BT=4, grid=2 (even).
    x1 = jax.random.normal(k_x1, (8, C, 3, 3), jnp.float32)
    y1 = custom_attention_head(x1, params)
    jax.block_until_ready(y1)
    r1 = reference_head(x1, params)
    if not np.allclose(np.asarray(y1), np.asarray(r1), atol=2e-3, rtol=2e-3):
        raise AssertionError(f"case1 mismatch:\n{np.asarray(y1)}\nvs\n{np.asarray(r1)}")

    # Case 2: HW already sublane-aligned (H=W=4), odd batch -> exercises batch
    # padding and the even-grid-step logic.
    x2 = jax.random.normal(k_x2, (5, C, 4, 4), jnp.float32)
    y2 = custom_attention_head(x2, params)
    jax.block_until_ready(y2)
    r2 = reference_head(x2, params)
    if not np.allclose(np.asarray(y2), np.asarray(r2), atol=2e-3, rtol=2e-3):
        raise AssertionError(f"case2 mismatch:\n{np.asarray(y2)}\nvs\n{np.asarray(r2)}")

    print("KERNEL_OK")
</pallas_src>

<mosaic_0001>
module attributes {stable_mosaic.version = 11 : i64} {
  func.func @head_kernel(%arg0: i32, %arg1: memref<4x16x256xbf16, #tpu.memory_space<vmem>>, %arg2: memref<256x64xbf16, #tpu.memory_space<vmem>>, %arg3: memref<1x64xf32, #tpu.memory_space<vmem>>, %arg4: memref<256x256xbf16, #tpu.memory_space<vmem>>, %arg5: memref<1x256xf32, #tpu.memory_space<vmem>>, %arg6: memref<1xf32, #tpu.memory_space<smem>>, %arg7: memref<256x128xbf16, #tpu.memory_space<vmem>>, %arg8: memref<1x128xf32, #tpu.memory_space<vmem>>, %arg9: memref<128x1xbf16, #tpu.memory_space<vmem>>, %arg10: memref<1x1xf32, #tpu.memory_space<vmem>>, %arg11: memref<1x1x4xf32, #tpu.memory_space<vmem>>) attributes {dimension_semantics = [#tpu.dimension_semantics<parallel>], iteration_bounds = array<i64: 2>, scalar_prefetch = 0 : i64, scratch_operands = 0 : i64, tpu.core_type = #tpu.core_type<tc>, window_params = [{transform_indices = @transform_0, window_bounds = array<i64: 4, 16, 256>}, {pipeline_mode = #tpu.pipeline_mode<synchronous>, transform_indices = @transform_1, window_bounds = array<i64: 256, 64>}, {pipeline_mode = #tpu.pipeline_mode<synchronous>, transform_indices = @transform_2, window_bounds = array<i64: 1, 64>}, {pipeline_mode = #tpu.pipeline_mode<synchronous>, transform_indices = @transform_3, window_bounds = array<i64: 256, 256>}, {pipeline_mode = #tpu.pipeline_mode<synchronous>, transform_indices = @transform_4, window_bounds = array<i64: 1, 256>}, {transform_indices = @transform_5, window_bounds = array<i64: 1>}, {pipeline_mode = #tpu.pipeline_mode<synchronous>, transform_indices = @transform_6, window_bounds = array<i64: 256, 128>}, {pipeline_mode = #tpu.pipeline_mode<synchronous>, transform_indices = @transform_7, window_bounds = array<i64: 1, 128>}, {pipeline_mode = #tpu.pipeline_mode<synchronous>, transform_indices = @transform_8, window_bounds = array<i64: 128, 1>}, {pipeline_mode = #tpu.pipeline_mode<synchronous>, transform_indices = @transform_9, window_bounds = array<i64: 1, 1>}, {transform_indices = @transform_10, window_bounds = array<i64: 1, 1, 4>}]} {
    %c0 = arith.constant 0 : index
    %c0_0 = arith.constant 0 : index
    %c0_1 = arith.constant 0 : index
    %0 = vector.load %arg1[%c0, %c0_0, %c0_1] : memref<4x16x256xbf16, #tpu.memory_space<vmem>>, vector<4x16x256xbf16>
    %1 = vector.shape_cast %0 : vector<4x16x256xbf16> to vector<64x256xbf16>
    %c0_2 = arith.constant 0 : index
    %c0_3 = arith.constant 0 : index
    %2 = vector.load %arg2[%c0_2, %c0_3] : memref<256x64xbf16, #tpu.memory_space<vmem>>, vector<256x64xbf16>
    %cst = arith.constant dense<0.000000e+00> : vector<64x64xf32>
    %3 = tpu.matmul %1, %2, %cst {dimension_numbers = #tpu.dot_dimension_numbers<[1], [0], [0], [1], [0, 0, 1, 1], [], []>} : vector<64x256xbf16>, vector<256x64xbf16>, vector<64x64xf32> -> vector<64x64xf32>
    %c0_4 = arith.constant 0 : index
    %c0_5 = arith.constant 0 : index
    %4 = vector.load %arg3[%c0_4, %c0_5] : memref<1x64xf32, #tpu.memory_space<vmem>>, vector<1x64xf32>
    %5 = vector.broadcast %4 : vector<1x64xf32> to vector<64x64xf32>
    %6 = arith.addf %3, %5 : vector<64x64xf32>
    %7 = vector.extract_strided_slice %6 {offsets = [0, 0], sizes = [64, 32], strides = [1, 1]} : vector<64x64xf32> to vector<64x32xf32>
    %8 = vector.shape_cast %7 : vector<64x32xf32> to vector<4x16x32xf32>
    %9 = vector.extract_strided_slice %6 {offsets = [0, 32], sizes = [64, 32], strides = [1, 1]} : vector<64x64xf32> to vector<64x32xf32>
    %10 = vector.shape_cast %9 : vector<64x32xf32> to vector<4x16x32xf32>
    "tpu.trace_start"() <{level = 10 : i32, message = "bic,bjc->bij"}> : () -> ()
    %cst_6 = arith.constant dense<0.000000e+00> : vector<4x16x16xf32>
    %11 = tpu.matmul %8, %10, %cst_6 {dimension_numbers = #tpu.dot_dimension_numbers<[2], [2], [1], [1], [0, 0, 0, 1, 1, 1], [0], [0]>} : vector<4x16x32xf32>, vector<4x16x32xf32>, vector<4x16x16xf32> -> vector<4x16x16xf32>
    "tpu.trace_stop"() : () -> ()
    %12 = tpu.iota {dimensions = array<i32: 1>} : vector<16x16xi32>
    %c9_i32 = arith.constant 9 : i32
    %13 = vector.broadcast %c9_i32 : i32 to vector<16x16xi32>
    %14 = arith.cmpi slt, %12, %13 : vector<16x16xi32>
    %15 = vector.shape_cast %14 : vector<16x16xi1> to vector<1x16x16xi1>
    %cst_7 = arith.constant -1.000000e+30 : f32
    %16 = vector.shape_cast %15 : vector<1x16x16xi1> to vector<1x16x16xi1>
    %17 = vector.broadcast %16 : vector<1x16x16xi1> to vector<4x16x16xi1>
    %18 = vector.broadcast %cst_7 : f32 to vector<4x16x16xf32>
    %19 = arith.select %17, %11, %18 : vector<4x16x16xi1>, vector<4x16x16xf32>
    %cst_8 = arith.constant dense<0xFF800000> : vector<4x16xf32>
    %20 = vector.multi_reduction <maximumf>, %19, %cst_8 [2] : vector<4x16x16xf32> to vector<4x16xf32>
    %21 = vector.shape_cast %20 : vector<4x16xf32> to vector<4x16x1xf32>
    %22 = vector.broadcast %21 : vector<4x16x1xf32> to vector<4x16x16xf32>
    %23 = arith.subf %19, %22 : vector<4x16x16xf32>
    %24 = math.exp %23 : vector<4x16x16xf32>
    %cst_9 = arith.constant dense<0.000000e+00> : vector<4x16xf32>
    %25 = vector.multi_reduction <add>, %24, %cst_9 [2] : vector<4x16x16xf32> to vector<4x16xf32>
    %26 = vector.shape_cast %25 : vector<4x16xf32> to vector<4x16x1xf32>
    %27 = tpu.reciprocal %26 {approx = true} : vector<4x16x1xf32> -> vector<4x16x1xf32>
    %28 = vector.broadcast %27 : vector<4x16x1xf32> to vector<4x16x16xf32>
    %29 = arith.mulf %24, %28 : vector<4x16x16xf32>
    %30 = tpu.iota {dimensions = array<i32: 0>} : vector<16x16xi32>
    %c9_i32_10 = arith.constant 9 : i32
    %31 = vector.broadcast %c9_i32_10 : i32 to vector<16x16xi32>
    %32 = arith.cmpi slt, %30, %31 : vector<16x16xi32>
    %33 = vector.shape_cast %32 : vector<16x16xi1> to vector<1x16x16xi1>
    %cst_11 = arith.constant 0.000000e+00 : f32
    %34 = vector.shape_cast %33 : vector<1x16x16xi1> to vector<1x16x16xi1>
    %35 = vector.broadcast %34 : vector<1x16x16xi1> to vector<4x16x16xi1>
    %36 = vector.broadcast %cst_11 : f32 to vector<4x16x16xf32>
    %37 = arith.select %35, %29, %36 : vector<4x16x16xi1>, vector<4x16x16xf32>
    %cst_12 = arith.constant dense<0.000000e+00> : vector<4x16xf32>
    %38 = vector.multi_reduction <add>, %37, %cst_12 [1] : vector<4x16x16xf32> to vector<4x16xf32>
    %cst_13 = arith.constant 0.111111112 : f32
    %39 = vector.broadcast %cst_13 : f32 to vector<4x16xf32>
    %40 = arith.mulf %38, %39 : vector<4x16xf32>
    %41 = vector.shape_cast %40 : vector<4x16xf32> to vector<4x16x1xf32>
    %42 = arith.extf %0 : vector<4x16x256xbf16> to vector<4x16x256xf32>
    %43 = vector.broadcast %41 : vector<4x16x1xf32> to vector<4x16x256xf32>
    %44 = arith.mulf %43, %42 : vector<4x16x256xf32>
    %cst_14 = arith.constant dense<0.000000e+00> : vector<4x256xf32>
    %45 = vector.multi_reduction <add>, %44, %cst_14 [1] : vector<4x16x256xf32> to vector<4x256xf32>
    %46 = arith.truncf %45 : vector<4x256xf32> to vector<4x256xbf16>
    %c0_15 = arith.constant 0 : index
    %c0_16 = arith.constant 0 : index
    %47 = vector.load %arg4[%c0_15, %c0_16] : memref<256x256xbf16, #tpu.memory_space<vmem>>, vector<256x256xbf16>
    %cst_17 = arith.constant dense<0.000000e+00> : vector<4x256xf32>
    %48 = tpu.matmul %46, %47, %cst_17 {dimension_numbers = #tpu.dot_dimension_numbers<[1], [0], [0], [1], [0, 0, 1, 1], [], []>} : vector<4x256xbf16>, vector<256x256xbf16>, vector<4x256xf32> -> vector<4x256xf32>
    %c0_18 = arith.constant 0 : index
    %c0_19 = arith.constant 0 : index
    %49 = vector.load %arg5[%c0_18, %c0_19] : memref<1x256xf32, #tpu.memory_space<vmem>>, vector<1x256xf32>
    %50 = vector.broadcast %49 : vector<1x256xf32> to vector<4x256xf32>
    %51 = arith.addf %48, %50 : vector<4x256xf32>
    %52 = arith.extf %0 : vector<4x16x256xbf16> to vector<4x16x256xf32>
    %cst_20 = arith.constant dense<0.000000e+00> : vector<4x256xf32>
    %53 = vector.multi_reduction <add>, %52, %cst_20 [1] : vector<4x16x256xf32> to vector<4x256xf32>
    %cst_21 = arith.constant 0.111111112 : f32
    %54 = vector.broadcast %cst_21 : f32 to vector<4x256xf32>
    %55 = arith.mulf %53, %54 : vector<4x256xf32>
    %c0_22 = arith.constant 0 : index
    %56 = memref.load %arg6[%c0_22] : memref<1xf32, #tpu.memory_space<smem>>
    %57 = vector.broadcast %56 : f32 to vector<4x256xf32>
    %58 = arith.mulf %57, %51 : vector<4x256xf32>
    %59 = arith.addf %58, %55 : vector<4x256xf32>
    %60 = arith.truncf %59 : vector<4x256xf32> to vector<4x256xbf16>
    %c0_23 = arith.constant 0 : index
    %c0_24 = arith.constant 0 : index
    %61 = vector.load %arg7[%c0_23, %c0_24] : memref<256x128xbf16, #tpu.memory_space<vmem>>, vector<256x128xbf16>
    %cst_25 = arith.constant dense<0.000000e+00> : vector<4x128xf32>
    %62 = tpu.matmul %60, %61, %cst_25 {dimension_numbers = #tpu.dot_dimension_numbers<[1], [0], [0], [1], [0, 0, 1, 1], [], []>} : vector<4x256xbf16>, vector<256x128xbf16>, vector<4x128xf32> -> vector<4x128xf32>
    %c0_26 = arith.constant 0 : index
    %c0_27 = arith.constant 0 : index
    %63 = vector.load %arg8[%c0_26, %c0_27] : memref<1x128xf32, #tpu.memory_space<vmem>>, vector<1x128xf32>
    %64 = vector.broadcast %63 : vector<1x128xf32> to vector<4x128xf32>
    %65 = arith.addf %62, %64 : vector<4x128xf32>
    %cst_28 = arith.constant 0.000000e+00 : f32
    %66 = vector.broadcast %cst_28 : f32 to vector<4x128xf32>
    %67 = arith.maximumf %65, %66 : vector<4x128xf32>
    %68 = arith.truncf %67 : vector<4x128xf32> to vector<4x128xbf16>
    %c0_29 = arith.constant 0 : index
    %c0_30 = arith.constant 0 : index
    %69 = vector.load %arg9[%c0_29, %c0_30] : memref<128x1xbf16, #tpu.memory_space<vmem>>, vector<128x1xbf16>
    %cst_31 = arith.constant dense<0.000000e+00> : vector<4x1xf32>
    %70 = tpu.matmul %68, %69, %cst_31 {dimension_numbers = #tpu.dot_dimension_numbers<[1], [0], [0], [1], [0, 0, 1, 1], [], []>} : vector<4x128xbf16>, vector<128x1xbf16>, vector<4x1xf32> -> vector<4x1xf32>
    %c0_32 = arith.constant 0 : index
    %c0_33 = arith.constant 0 : index
    %71 = vector.load %arg10[%c0_32, %c0_33] : memref<1x1xf32, #tpu.memory_space<vmem>>, vector<1x1xf32>
    %72 = vector.broadcast %71 : vector<1x1xf32> to vector<4x1xf32>
    %73 = arith.addf %70, %72 : vector<4x1xf32>
    %74 = arith.negf %73 : vector<4x1xf32>
    %75 = math.exp %74 : vector<4x1xf32>
    %cst_34 = arith.constant 1.000000e+00 : f32
    %76 = vector.broadcast %cst_34 : f32 to vector<4x1xf32>
    %77 = arith.addf %76, %75 : vector<4x1xf32>
    %78 = arith.divf %76, %77 : vector<4x1xf32>
    %79 = vector.shape_cast %78 : vector<4x1xf32> to vector<1x1x4xf32>
    %c0_35 = arith.constant 0 : index
    %c0_36 = arith.constant 0 : index
    %c0_37 = arith.constant 0 : index
    %80 = vector.load %arg11[%c0_35, %c0_36, %c0_37] : memref<1x1x4xf32, #tpu.memory_space<vmem>>, vector<1x1x4xf32>
    tpu.vector_store %arg11[%c0_35, %c0_36, %c0_37], %79 {strides = array<i32>} : memref<1x1x4xf32, #tpu.memory_space<vmem>>, vector<1x1x4xf32>,
    return
  }
  func.func @transform_0(%arg0: i32) -> (i32, i32, i32) {
    %c0_i32 = arith.constant 0 : i32
    %c0_i32_0 = arith.constant 0 : i32
    %c0_i32_1 = arith.constant 0 : i32
    return %arg0, %c0_i32, %c0_i32_0 : i32, i32, i32
  }
  func.func @transform_1(%arg0: i32) -> (i32, i32) {
    %c0_i32 = arith.constant 0 : i32
    %c0_i32_0 = arith.constant 0 : i32
    %c0_i32_1 = arith.constant 0 : i32
    return %c0_i32, %c0_i32_0 : i32, i32
  }
  func.func @transform_2(%arg0: i32) -> (i32, i32) {
    %c0_i32 = arith.constant 0 : i32
    %c0_i32_0 = arith.constant 0 : i32
    %c0_i32_1 = arith.constant 0 : i32
    return %c0_i32, %c0_i32_0 : i32, i32
  }
  func.func @transform_3(%arg0: i32) -> (i32, i32) {
    %c0_i32 = arith.constant 0 : i32
    %c0_i32_0 = arith.constant 0 : i32
    %c0_i32_1 = arith.constant 0 : i32
    return %c0_i32, %c0_i32_0 : i32, i32
  }
  func.func @transform_4(%arg0: i32) -> (i32, i32) {
    %c0_i32 = arith.constant 0 : i32
    %c0_i32_0 = arith.constant 0 : i32
    %c0_i32_1 = arith.constant 0 : i32
    return %c0_i32, %c0_i32_0 : i32, i32
  }
  func.func @transform_5(%arg0: i32) -> i32 {
    %c0_i32 = arith.constant 0 : i32
    %c0_i32_0 = arith.constant 0 : i32
    return %c0_i32 : i32
  }
  func.func @transform_6(%arg0: i32) -> (i32, i32) {
    %c0_i32 = arith.constant 0 : i32
    %c0_i32_0 = arith.constant 0 : i32
    %c0_i32_1 = arith.constant 0 : i32
    return %c0_i32, %c0_i32_0 : i32, i32
  }
  func.func @transform_7(%arg0: i32) -> (i32, i32) {
    %c0_i32 = arith.constant 0 : i32
    %c0_i32_0 = arith.constant 0 : i32
    %c0_i32_1 = arith.constant 0 : i32
    return %c0_i32, %c0_i32_0 : i32, i32
  }
  func.func @transform_8(%arg0: i32) -> (i32, i32) {
    %c0_i32 = arith.constant 0 : i32
    %c0_i32_0 = arith.constant 0 : i32
    %c0_i32_1 = arith.constant 0 : i32
    return %c0_i32, %c0_i32_0 : i32, i32
  }
  func.func @transform_9(%arg0: i32) -> (i32, i32) {
    %c0_i32 = arith.constant 0 : i32
    %c0_i32_0 = arith.constant 0 : i32
    %c0_i32_1 = arith.constant 0 : i32
    return %c0_i32, %c0_i32_0 : i32, i32
  }
  func.func @transform_10(%arg0: i32) -> (i32, i32, i32) {
    %c0_i32 = arith.constant 0 : i32
    %c0_i32_0 = arith.constant 0 : i32
    %c0_i32_1 = arith.constant 0 : i32
    return %arg0, %c0_i32, %c0_i32_0 : i32, i32, i32
  }
}

</mosaic_0001>

<llo_original>
// kernel: tpu_custom_call.1
$region0: #{tpu_custom_call.1}
  #allocation0 [shape = 'u32[]', space=smem, size = 0x4, offset = 0x4, fixed_abs, tag = 'smem constant byte address 0x4 - core index']
  #allocation1 [shape = 'u32[72,128]{1,0:T(1,128)}', space=vmem, size = 0x9000, scoped, tag = 'internal scratch']
  #allocation2 [shape = 'f32[1]{0:T(128)S(6)}', space=smem, size = 0x200, scoped, tag = 'scoped memory for tpu_custom_call.1']
  #allocation3 [shape = 'f32[1,1]{1,0:T(1,128)S(1)}', space=vmem, size = 0x200, scoped, tag = 'scoped memory for tpu_custom_call.1']
  %s0 = inlined_call_operand.vmem [shape: bf16[8,16,256], index: 0, kind: input, shape index: {}]
  %s1 = inlined_call_operand.vmem [shape: bf16[256,64], index: 1, kind: input, shape index: {}]
  %s2 = inlined_call_operand.vmem [shape: f32[1,64], index: 2, kind: input, shape index: {}]
  %s3 = inlined_call_operand.hbm [shape: bf16[256,256], index: 3, kind: input, shape index: {}]
  %s4 = inlined_call_operand.vmem [shape: f32[1,256], index: 4, kind: input, shape index: {}]
  %s5 = inlined_call_operand.<no memory space> [shape: f32[1], index: 5, kind: input, shape index: {}]
  %s6 = inlined_call_operand.hbm [shape: bf16[256,128], index: 6, kind: input, shape index: {}]
  %s7 = inlined_call_operand.vmem [shape: f32[1,128], index: 7, kind: input, shape index: {}]
  %s8 = inlined_call_operand.vmem [shape: bf16[128,1], index: 8, kind: input, shape index: {}]
  %s9 = inlined_call_operand.<no memory space> [shape: f32[1,1], index: 9, kind: input, shape index: {}]
  %s10 = inlined_call_operand.hbm [shape: f32[2,1,4], index: 10, kind: output, shape index: {}]
  %s11 = sld [smem:[#allocation0]]
  $region81: #{tpu_custom_call.1} parent=0
    _
  %s13 = ssub.s32 1, %s11
  %s14 = scalar_select 0, %s13, %s11
  %15 = sst [smem:[#allocation2]] %s5
  %v16 = vstv %s9
  %17 = vst [vmem:[#allocation3] sm:$0x1] %v16
  $region1: #{tpu_custom_call.1} parent=0
    #allocation4 [shape = 'u8[131072]{0}', space=vmem, size = 0x20000, scoped, tag = 'input window, operand 3, single buffered']
    #allocation5 [shape = 's32[2]{0}', space=sflag, size = 0x8, scoped, tag = 'scoped memory for tpu_custom_call.1']
    #allocation6 [shape = 's32[2]{0}', space=sflag, size = 0x8, scoped, tag = 'scoped memory for tpu_custom_call.1']
    #allocation7 [shape = 'u8[65536]{0}', space=vmem, size = 0x10000, scoped, tag = 'input window, operand 6, single buffered']
    #allocation8 [shape = 's32[1]{0}', space=sflag, size = 0x4, scoped, tag = 'scoped memory for tpu_custom_call.1']
    #allocation9 [shape = 'u8[1024]{0}', space=vmem, size = 0x400, scoped, tag = 'output window, operand 0']
    %18 = vsyncpa [#allocation5], 0
    %19 = vsyncpa [#allocation8], 0
    %20 = vsyncpa [#allocation6], 0
    %s21 = scalar_lea.sflag [#allocation6], 1
    %22 = vsyncpa %s21, 0
    loop: start=0, step=1, limit=4
    $region2: #{tpu_custom_call.1} parent=1 // loop_pre_header
      _
    $region3: #{tpu_custom_call.1} parent=1 // loop_header
      %s24 = sphi 0, %s28
      %p25 = scmp.ge.s32.totalorder %s24, 4
      %s34 = sphi 0, %s36
      %s37 = sphi 0, %s34
      %s38 = sphi 0, %s37
      %s54 = sphi 0, %s38
      %s58 = sphi 0, %s58
      %s60 = sphi 0, %s58
      %s61 = sphi 0, %s60
      %s75 = sphi 0, %s61
      %s79 = sphi 0, %s79
      %s81 = sphi 0, %s79
      %s82 = sphi 0, %s81
      %s96 = sphi 0, %s82
      %s100 = sphi 0, %s100
      %s102 = sphi 0, %s100
      %s103 = sphi 0, %s102
      %s117 = sphi 0, %s103
      %s121 = sphi 0, %s121
      %s123 = sphi 0, %s121
      %s124 = sphi 0, %s123
      %s138 = sphi 0, %s124
      %s142 = sphi 0, %s142
      %s144 = sphi 0, %s142
      %s145 = sphi 0, %s144
      %s159 = sphi 0, %s145
      %s163 = sphi 0, %s163
      %s165 = sphi 0, %s163
      %s166 = sphi 0, %s165
      %s180 = sphi 0, %s166
      %s184 = sphi 0, %s184
      %s186 = sphi 0, %s184
      %s187 = sphi 0, %s186
      %s201 = sphi 0, %s187
      %s205 = sphi 0, %s205
      %s207 = sphi 0, %s205
      %s208 = sphi 0, %s207
      %s222 = sphi 0, %s208
      %s226 = sphi 0, %s226
      %s228 = sphi 0, %s226
      %s229 = sphi 0, %s228
      %s243 = sphi 0, %s229
      %s249 = sphi 0, %s251
      %s252 = sphi 0, %s249
      %s253 = sphi 0, %s252
      %s269 = sphi 0, %s253
    $region4: #{tpu_custom_call.1} parent=1 // loop_header_branch
      %27 = sbr.rel (%p25) target = $region8
    $region5: #{tpu_custom_call.1} parent=1 // loop_body
      %s29 = ssub.s32 %s24, 1
      %s30 = ssub.s32 %s24, 2
      %s31 = sadd.s32 %s24, 1
      %s32 = ssub.s32 %s24, %s31
      %p33 = scmp.eq.s32.totalorder %s32, 0
      %s35 = sadd.s32 %s34, 1
      %s36 = scalar_select %p33, %s34, %s35
      %p39 = pneg %p33
      %p40 = scmp.eq.s32.totalorder %s24, 1
      %p41 = por %p39, %p40
      %p42 = scmp.ne.s32.totalorder %s34, %s37
      %p43 = scmp.eq.s32.totalorder %s24, 0
      %p44 = por %p42, %p43
      %p45 = scmp.ne.s32.totalorder %s34, %s37
      %p46 = scmp.eq.s32.totalorder %s29, 1
      %p47 = por %p45, %p46
      %p48 = scmp.ne.s32.totalorder %s37, %s38
      %p49 = scmp.eq.s32.totalorder %s29, 0
      %p50 = por %p48, %p49
      %p51 = scmp.ne.s32.totalorder %s37, %s38
      %p52 = scmp.eq.s32.totalorder %s30, 1
      %p53 = por %p51, %p52
      %p55 = scmp.ne.s32.totalorder %s38, %s54
      %p56 = scmp.eq.s32.totalorder %s30, 0
      %p57 = por %p55, %p56
      %s59 = sadd.s32 %s58, 1
      %p62 = scmp.eq.s32.totalorder %s24, 1
      %p63 = scmp.ne.s32.totalorder %s58, %s60
      %p64 = scmp.eq.s32.totalorder %s24, 0
      %p65 = por %p63, %p64
      %p66 = scmp.ne.s32.totalorder %s58, %s60
      %p67 = scmp.eq.s32.totalorder %s29, 1
      %p68 = por %p66, %p67
      %p69 = scmp.ne.s32.totalorder %s60, %s61
      %p70 = scmp.eq.s32.totalorder %s29, 0
      %p71 = por %p69, %p70
      %p72 = scmp.ne.s32.totalorder %s60, %s61
      %p73 = scmp.eq.s32.totalorder %s30, 1
      %p74 = por %p72, %p73
      %p76 = scmp.ne.s32.totalorder %s61, %s75
      %p77 = scmp.eq.s32.totalorder %s30, 0
      %p78 = por %p76, %p77
      %s80 = sadd.s32 %s79, 1
      %p83 = scmp.eq.s32.totalorder %s24, 1
      %p84 = scmp.ne.s32.totalorder %s79, %s81
      %p85 = scmp.eq.s32.totalorder %s24, 0
      %p86 = por %p84, %p85
      %p87 = scmp.ne.s32.totalorder %s79, %s81
      %p88 = scmp.eq.s32.totalorder %s29, 1
      %p89 = por %p87, %p88
      %p90 = scmp.ne.s32.totalorder %s81, %s82
      %p91 = scmp.eq.s32.totalorder %s29, 0
      %p92 = por %p90, %p91
      %p93 = scmp.ne.s32.totalorder %s81, %s82
      %p94 = scmp.eq.s32.totalorder %s30, 1
      %p95 = por %p93, %p94
      %p97 = scmp.ne.s32.totalorder %s82, %s96
      %p98 = scmp.eq.s32.totalorder %s30, 0
      %p99 = por %p97, %p98
      %s101 = sadd.s32 %s100, 1
      %p104 = scmp.eq.s32.totalorder %s24, 1
      %p105 = scmp.ne.s32.totalorder %s100, %s102
      %p106 = scmp.eq.s32.totalorder %s24, 0
      %p107 = por %p105, %p106
      %p108 = scmp.ne.s32.totalorder %s100, %s102
      %p109 = scmp.eq.s32.totalorder %s29, 1
      %p110 = por %p108, %p109
      %p111 = scmp.ne.s32.totalorder %s102, %s103
      %p112 = scmp.eq.s32.totalorder %s29, 0
      %p113 = por %p111, %p112
      %p114 = scmp.ne.s32.totalorder %s102, %s103
      %p115 = scmp.eq.s32.totalorder %s30, 1
      %p116 = por %p114, %p115
      %p118 = scmp.ne.s32.totalorder %s103, %s117
      %p119 = scmp.eq.s32.totalorder %s30, 0
      %p120 = por %p118, %p119
      %s122 = sadd.s32 %s121, 1
      %p125 = scmp.eq.s32.totalorder %s24, 1
      %p126 = scmp.ne.s32.totalorder %s121, %s123
      %p127 = scmp.eq.s32.totalorder %s24, 0
      %p128 = por %p126, %p127
      %p129 = scmp.ne.s32.totalorder %s121, %s123
      %p130 = scmp.eq.s32.totalorder %s29, 1
      %p131 = por %p129, %p130
      %p132 = scmp.ne.s32.totalorder %s123, %s124
      %p133 = scmp.eq.s32.totalorder %s29, 0
      %p134 = por %p132, %p133
      %p135 = scmp.ne.s32.totalorder %s123, %s124
      %p136 = scmp.eq.s32.totalorder %s30, 1
      %p137 = por %p135, %p136
      %p139 = scmp.ne.s32.totalorder %s124, %s138
      %p140 = scmp.eq.s32.totalorder %s30, 0
      %p141 = por %p139, %p140
      %s143 = sadd.s32 %s142, 1
      %p146 = scmp.eq.s32.totalorder %s24, 1
      %p147 = scmp.ne.s32.totalorder %s142, %s144
      %p148 = scmp.eq.s32.totalorder %s24, 0
      %p149 = por %p147, %p148
      %p150 = scmp.ne.s32.totalorder %s142, %s144
      %p151 = scmp.eq.s32.totalorder %s29, 1
      %p152 = por %p150, %p151
      %p153 = scmp.ne.s32.totalorder %s144, %s145
      %p154 = scmp.eq.s32.totalorder %s29, 0
      %p155 = por %p153, %p154
      %p156 = scmp.ne.s32.totalorder %s144, %s145
      %p157 = scmp.eq.s32.totalorder %s30, 1
      %p158 = por %p156, %p157
      %p160 = scmp.ne.s32.totalorder %s145, %s159
      %p161 = scmp.eq.s32.totalorder %s30, 0
      %p162 = por %p160, %p161
      %s164 = sadd.s32 %s163, 1
      %p167 = scmp.eq.s32.totalorder %s24, 1
      %p168 = scmp.ne.s32.totalorder %s163, %s165
      %p169 = scmp.eq.s32.totalorder %s24, 0
      %p170 = por %p168, %p169
      %p171 = scmp.ne.s32.totalorder %s163, %s165
      %p172 = scmp.eq.s32.totalorder %s29, 1
      %p173 = por %p171, %p172
      %p174 = scmp.ne.s32.totalorder %s165, %s166
      %p175 = scmp.eq.s32.totalorder %s29, 0
      %p176 = por %p174, %p175
      %p177 = scmp.ne.s32.totalorder %s165, %s166
      %p178 = scmp.eq.s32.totalorder %s30, 1
      %p179 = por %p177, %p178
      %p181 = scmp.ne.s32.totalorder %s166, %s180
      %p182 = scmp.eq.s32.totalorder %s30, 0
      %p183 = por %p181, %p182
      %s185 = sadd.s32 %s184, 1
      %p188 = scmp.eq.s32.totalorder %s24, 1
      %p189 = scmp.ne.s32.totalorder %s184, %s186
      %p190 = scmp.eq.s32.totalorder %s24, 0
      %p191 = por %p189, %p190
      %p192 = scmp.ne.s32.totalorder %s184, %s186
      %p193 = scmp.eq.s32.totalorder %s29, 1
      %p194 = por %p192, %p193
      %p195 = scmp.ne.s32.totalorder %s186, %s187
      %p196 = scmp.eq.s32.totalorder %s29, 0
      %p197 = por %p195, %p196
      %p198 = scmp.ne.s32.totalorder %s186, %s187
      %p199 = scmp.eq.s32.totalorder %s30, 1
      %p200 = por %p198, %p199
      %p202 = scmp.ne.s32.totalorder %s187, %s201
      %p203 = scmp.eq.s32.totalorder %s30, 0
      %p204 = por %p202, %p203
      %s206 = sadd.s32 %s205, 1
      %p209 = scmp.eq.s32.totalorder %s24, 1
      %p210 = scmp.ne.s32.totalorder %s205, %s207
      %p211 = scmp.eq.s32.totalorder %s24, 0
      %p212 = por %p210, %p211
      %p213 = scmp.ne.s32.totalorder %s205, %s207
      %p214 = scmp.eq.s32.totalorder %s29, 1
      %p215 = por %p213, %p214
      %p216 = scmp.ne.s32.totalorder %s207, %s208
      %p217 = scmp.eq.s32.totalorder %s29, 0
      %p218 = por %p216, %p217
      %p219 = scmp.ne.s32.totalorder %s207, %s208
      %p220 = scmp.eq.s32.totalorder %s30, 1
      %p221 = por %p219, %p220
      %p223 = scmp.ne.s32.totalorder %s208, %s222
      %p224 = scmp.eq.s32.totalorder %s30, 0
      %p225 = por %p223, %p224
      %s227 = sadd.s32 %s226, 1
      %p230 = scmp.eq.s32.totalorder %s24, 1
      %p231 = scmp.ne.s32.totalorder %s226, %s228
      %p232 = scmp.eq.s32.totalorder %s24, 0
      %p233 = por %p231, %p232
      %p234 = scmp.ne.s32.totalorder %s226, %s228
      %p235 = scmp.eq.s32.totalorder %s29, 1
      %p236 = por %p234, %p235
      %p237 = scmp.ne.s32.totalorder %s228, %s229
      %p238 = scmp.eq.s32.totalorder %s29, 0
      %p239 = por %p237, %p238
      %p240 = scmp.ne.s32.totalorder %s228, %s229
      %p241 = scmp.eq.s32.totalorder %s30, 1
      %p242 = por %p240, %p241
      %p244 = scmp.ne.s32.totalorder %s229, %s243
      %p245 = scmp.eq.s32.totalorder %s30, 0
      %p246 = por %p244, %p245
      %s247 = ssub.s32 %s24, %s31
      %p248 = scmp.eq.s32.totalorder %s247, 0
      %s250 = sadd.s32 %s249, 1
      %s251 = scalar_select %p248, %s249, %s250
      %p254 = pneg %p248
      %p255 = scmp.eq.s32.totalorder %s24, 1
      %p256 = por %p254, %p255
      %p257 = scmp.ne.s32.totalorder %s249, %s252
      %p258 = scmp.eq.s32.totalorder %s24, 0
      %p259 = por %p257, %p258
      %p260 = scmp.ne.s32.totalorder %s249, %s252
      %p261 = scmp.eq.s32.totalorder %s29, 1
      %p262 = por %p260, %p261
      %p263 = scmp.ne.s32.totalorder %s252, %s253
      %p264 = scmp.eq.s32.totalorder %s29, 0
      %p265 = por %p263, %p264
      %p266 = scmp.ne.s32.totalorder %s252, %s253
      %p267 = scmp.eq.s32.totalorder %s30, 1
      %p268 = por %p266, %p267
      %p270 = scmp.ne.s32.totalorder %s253, %s269
      %p271 = scmp.eq.s32.totalorder %s30, 0
      %p272 = por %p270, %p271
      %p273 = scmp.le.s32.totalorder 1, %s24
      %p274 = scmp.lt.s32.totalorder %s24, 3
      %p275 = pnand %p273, %p274
      %p276 = pneg %p275
      // Predicated region
      $region9: #{tpu_custom_call.1} parent=5 // pred_check
        _
      $region10: #{tpu_custom_call.1} parent=5 // pred_check_branch
        %278 = sbr.rel (%p275) target = $region12
      $region11: #{tpu_custom_call.1} parent=5 // pred_region
        %s279 = ssub.s32 %s24, 1
        // Predicated region
        $region13: #{tpu_custom_call.1} parent=11 // pred_check
          %p280 = pneg %p71
        $region14: #{tpu_custom_call.1} parent=11 // pred_check_branch
          %282 = sbr.rel (%p280) target = $region16
        $region15: #{tpu_custom_call.1} parent=11 // pred_region
          _
        $region16: #{tpu_custom_call.1} parent=11 // pred_fallthru
          _
        // Predicated region
        $region17: #{tpu_custom_call.1} parent=11 // pred_check
          %p283 = pneg %p92
        $region18: #{tpu_custom_call.1} parent=11 // pred_check_branch
          %285 = sbr.rel (%p283) target = $region20
        $region19: #{tpu_custom_call.1} parent=11 // pred_region
          _
        $region20: #{tpu_custom_call.1} parent=11 // pred_fallthru
          _
        // Predicated region
        $region21: #{tpu_custom_call.1} parent=11 // pred_check
          %p286 = pneg %p113
        $region22: #{tpu_custom_call.1} parent=11 // pred_check_branch
          %288 = sbr.rel (%p286) target = $region24
        $region23: #{tpu_custom_call.1} parent=11 // pred_region
          %290 = vsyncadd [#allocation5], 0
          %s291 = sshll.u32 %s3, 4
          %s292 = int_to_ptr.hbm [resolvable:$true] %s291
          %s293 = sshll.u32 [#allocation4], 4
          %s294 = int_to_ptr.vmem [resolvable:$true] %s293
          %299 = dma.hbm_to_vmem [thread:$0]  %s292, 4096, %s294, [#allocation5], 128, 128, 8
        $region24: #{tpu_custom_call.1} parent=11 // pred_fallthru
          _
        // Predicated region
        $region25: #{tpu_custom_call.1} parent=11 // pred_check
          %p300 = pneg %p134
        $region26: #{tpu_custom_call.1} parent=11 // pred_check_branch
          %302 = sbr.rel (%p300) target = $region28
        $region27: #{tpu_custom_call.1} parent=11 // pred_region
          _
        $region28: #{tpu_custom_call.1} parent=11 // pred_fallthru
          _
        // Predicated region
        $region29: #{tpu_custom_call.1} parent=11 // pred_check
          %p303 = pneg %p155
        $region30: #{tpu_custom_call.1} parent=11 // pred_check_branch
          %305 = sbr.rel (%p303) target = $region32
        $region31: #{tpu_custom_call.1} parent=11 // pred_region
          _
        $region32: #{tpu_custom_call.1} parent=11 // pred_fallthru
          _
        // Predicated region
        $region33: #{tpu_custom_call.1} parent=11 // pred_check
          %p306 = pneg %p176
        $region34: #{tpu_custom_call.1} parent=11 // pred_check_branch
          %308 = sbr.rel (%p306) target = $region36
        $region35: #{tpu_custom_call.1} parent=11 // pred_region
          %310 = vsyncadd [#allocation8], 0
          %s311 = sshll.u32 %s6, 4
          %s312 = int_to_ptr.hbm [resolvable:$true] %s311
          %s313 = sshll.u32 [#allocation7], 4
          %s314 = int_to_ptr.vmem [resolvable:$true] %s313
          %319 = dma.hbm_to_vmem [thread:$0]  %s312, 2048, %s314, [#allocation8], 64, 64, 4
        $region36: #{tpu_custom_call.1} parent=11 // pred_fallthru
          _
        // Predicated region
        $region37: #{tpu_custom_call.1} parent=11 // pred_check
          %p320 = pneg %p197
        $region38: #{tpu_custom_call.1} parent=11 // pred_check_branch
          %322 = sbr.rel (%p320) target = $region40
        $region39: #{tpu_custom_call.1} parent=11 // pred_region
          _
        $region40: #{tpu_custom_call.1} parent=11 // pred_fallthru
          _
        // Predicated region
        $region41: #{tpu_custom_call.1} parent=11 // pred_check
          %p323 = pneg %p218
        $region42: #{tpu_custom_call.1} parent=11 // pred_check_branch
          %325 = sbr.rel (%p323) target = $region44
        $region43: #{tpu_custom_call.1} parent=11 // pred_region
          _
        $region44: #{tpu_custom_call.1} parent=11 // pred_fallthru
          _
        // Predicated region
        $region45: #{tpu_custom_call.1} parent=11 // pred_check
          %p326 = pneg %p239
        $region46: #{tpu_custom_call.1} parent=11 // pred_check_branch
          %328 = sbr.rel (%p326) target = $region48
        $region47: #{tpu_custom_call.1} parent=11 // pred_region
          _
        $region48: #{tpu_custom_call.1} parent=11 // pred_fallthru
          _
      $region12: #{tpu_custom_call.1} parent=5 // pred_fallthru
        _
      %p329 = scmp.lt.s32.totalorder %s24, 2
      // Predicated region
      $region49: #{tpu_custom_call.1} parent=5 // pred_check
        %p330 = pneg %p329
      $region50: #{tpu_custom_call.1} parent=5 // pred_check_branch
        %332 = sbr.rel (%p330) target = $region52
      $region51: #{tpu_custom_call.1} parent=5 // pred_region
        // Predicated region
        $region53: #{tpu_custom_call.1} parent=51 // pred_check
          %p333 = pneg %p44
        $region54: #{tpu_custom_call.1} parent=51 // pred_check_branch
          %335 = sbr.rel (%p333) target = $region56
        $region55: #{tpu_custom_call.1} parent=51 // pred_region
          %s336 = smul.u32 4, %s24
          %p337 = scmp.lt.s32.totalorder %s336, 7
          %s338 = scalar_select %p337, %s336, 7
          %s339 = smul.addr %s338, 4
          %s340 = smul.addr %s339, 4
          %s341 = scalar_lea.vmem %s0, %s340
          %s342 = smul.u32 4, %s24
        $region56: #{tpu_custom_call.1} parent=51 // pred_fallthru
          _
      $region52: #{tpu_custom_call.1} parent=5 // pred_fallthru
        _
      %p343 = scmp.le.s32.totalorder 1, %s24
      %p344 = scmp.lt.s32.totalorder %s24, 3
      %p345 = pnand %p343, %p344
      %p346 = pneg %p345
      // Predicated region
      $region57: #{tpu_custom_call.1} parent=5 // pred_check
        _
      $region58: #{tpu_custom_call.1} parent=5 // pred_check_branch
        %348 = sbr.rel (%p345) target = $region60
      $region59: #{tpu_custom_call.1} parent=5 // pred_region
        %s349 = ssub.s32 %s24, 1
        // Predicated region
        $region61: #{tpu_custom_call.1} parent=59 // pred_check
          %p350 = pneg %p113
        $region62: #{tpu_custom_call.1} parent=59 // pred_check_branch
          %352 = sbr.rel (%p350) target = $region64
        $region63: #{tpu_custom_call.1} parent=59 // pred_region
          %354 = dma.done [#allocation5], 4096
        $region64: #{tpu_custom_call.1} parent=59 // pred_fallthru
          _
        // Predicated region
        $region65: #{tpu_custom_call.1} parent=59 // pred_check
          %p355 = pneg %p176
        $region66: #{tpu_custom_call.1} parent=59 // pred_check_branch
          %357 = sbr.rel (%p355) target = $region68
        $region67: #{tpu_custom_call.1} parent=59 // pred_region
          %359 = dma.done [#allocation8], 2048
        $region68: #{tpu_custom_call.1} parent=59 // pred_fallthru
          _
        %s360 = smul.u32 4, %s29
        %p361 = scmp.lt.s32.totalorder %s360, 7
        %s362 = scalar_select %p361, %s360, 7
        %s363 = smul.addr %s362, 4
        %s364 = smul.addr %s363, 4
        %s365 = scalar_lea.vmem %s0, %s364
        %p366 = pneg %p50
        %p367 = pneg %p47
        %p368 = pneg %p71
        %p369 = pneg %p68
        %p370 = pneg %p92
        %p371 = pneg %p89
        %p372 = pneg %p113
        %p373 = pneg %p110
        %p374 = pneg %p134
        %p375 = pneg %p131
        %p376 = pneg %p155
        %p377 = pneg %p152
        %p378 = pneg %p176
        %p379 = pneg %p173
        %p380 = pneg %p197
        %p381 = pneg %p194
        %p382 = pneg %p218
        %p383 = pneg %p215
        %p384 = pneg %p239
        %p385 = pneg %p236
        %p386 = pneg %p265
        %p387 = pneg %p262
        %s388 = sand.u32 %s252, 1
        %s389 = scalar_lea.sflag [#allocation6], %s388
        %s390 = sand.u32 %s252, 1
        %s391 = scalar_lea.vmem [#allocation9], %s390
        %s392 = smul.u32 4, %s29
        %p393 = scmp.lt.s32.totalorder %s392, 7
        %s394 = scalar_select %p393, %s392, 7
        %s395 = smul.addr %s394, 4
        %s396 = smul.addr %s395, 4
        %s397 = scalar_lea.vmem %s0, %s396
        %s398 = smul.u32 4, %s29
        %v399 = vld [vmem:[%s397] sm:$0xff]
        %v400 = vld [vmem:[%s397 + $0x8] sm:$0xff]
        %v401 = vld [vmem:[%s397 + $0x10] sm:$0xff]
        %v402 = vld [vmem:[%s397 + $0x18] sm:$0xff]
        %v403 = vld [vmem:[%s397 + $0x20] sm:$0xff]
        %v404 = vld [vmem:[%s397 + $0x28] sm:$0xff]
        %v405 = vld [vmem:[%s397 + $0x30] sm:$0xff]
        %v406 = vld [vmem:[%s397 + $0x38] sm:$0xff]
        %v407 = vld [vmem:[%s1] sm:$0xf]
        %v408 = vld [vmem:[%s1 + $0x4] sm:$0xf]
        %v409 = vld [vmem:[%s1 + $0x8] sm:$0xf]
        %v410 = vld [vmem:[%s1 + $0xc] sm:$0xf]
        %v411 = vld [vmem:[%s1 + $0x10] sm:$0xf]
        %v412 = vld [vmem:[%s1 + $0x14] sm:$0xf]
        %v413 = vld [vmem:[%s1 + $0x18] sm:$0xf]
        %v414 = vld [vmem:[%s1 + $0x1c] sm:$0xf]
        %v415 = vld [vmem:[%s1 + $0x20] sm:$0xf]
        %v416 = vld [vmem:[%s1 + $0x24] sm:$0xf]
        %v417 = vld [vmem:[%s1 + $0x28] sm:$0xf]
        %v418 = vld [vmem:[%s1 + $0x2c] sm:$0xf]
        %v419 = vld [vmem:[%s1 + $0x30] sm:$0xf]
        %v420 = vld [vmem:[%s1 + $0x34] sm:$0xf]
        %v421 = vld [vmem:[%s1 + $0x38] sm:$0xf]
        %v422 = vld [vmem:[%s1 + $0x3c] sm:$0xf]
        %v423 = vld [vmem:[%s1 + $0x40] sm:$0xf]
        %v424 = vld [vmem:[%s1 + $0x44] sm:$0xf]
        %v425 = vld [vmem:[%s1 + $0x48] sm:$0xf]
        %v426 = vld [vmem:[%s1 + $0x4c] sm:$0xf]
        %v427 = vld [vmem:[%s1 + $0x50] sm:$0xf]
        %v428 = vld [vmem:[%s1 + $0x54] sm:$0xf]
        %v429 = vld [vmem:[%s1 + $0x58] sm:$0xf]
        %v430 = vld [vmem:[%s1 + $0x5c] sm:$0xf]
        %v431 = vld [vmem:[%s1 + $0x60] sm:$0xf]
        %v432 = vld [vmem:[%s1 + $0x64] sm:$0xf]
        %v433 = vld [vmem:[%s1 + $0x68] sm:$0xf]
        %v434 = vld [vmem:[%s1 + $0x6c] sm:$0xf]
        %v435 = vld [vmem:[%s1 + $0x70] sm:$0xf]
        %v436 = vld [vmem:[%s1 + $0x74] sm:$0xf]
        %v437 = vld [vmem:[%s1 + $0x78] sm:$0xf]
        %v438 = vld [vmem:[%s1 + $0x7c] sm:$0xf]
        %v439 = vld [vmem:[%s2] sm:$0x1]
        %v441 = vperm.slane %v439, 0
        %v451 = vunpack.c.l.b16 %v399
        %v452 = vunpack.c.h.b16 %v399
        %v453 = vunpack.c.l.b16 %v400
        %v454 = vunpack.c.h.b16 %v400
        %v455 = vunpack.c.l.b16 %v401
        %v456 = vunpack.c.h.b16 %v401
        %v457 = vunpack.c.l.b16 %v402
        %v458 = vunpack.c.h.b16 %v402
        %v459 = vunpack.c.l.b16 %v403
        %v460 = vunpack.c.h.b16 %v403
        %v461 = vunpack.c.l.b16 %v404
        %v462 = vunpack.c.h.b16 %v404
        %v463 = vunpack.c.l.b16 %v405
        %v464 = vunpack.c.h.b16 %v405
        %v465 = vunpack.c.l.b16 %v406
        %v466 = vunpack.c.h.b16 %v406
        %v467 = vpack.c.b16 %v453, %v451
        %v468 = vpack.c.b16 %v454, %v452
        %v469 = vpack.c.b16 %v457, %v455
        %v470 = vpack.c.b16 %v458, %v456
        %v471 = vpack.c.b16 %v461, %v459
        %v472 = vpack.c.b16 %v462, %v460
        %v473 = vpack.c.b16 %v465, %v463
        %v474 = vpack.c.b16 %v466, %v464
        %v515 = vunpack.c.l.b16 %v407
        %v516 = vunpack.c.l.b16 %v408
        %v517 = vunpack.c.l.b16 %v409
        %v518 = vunpack.c.l.b16 %v410
        %v519 = vunpack.c.l.b16 %v411
        %v520 = vunpack.c.l.b16 %v412
        %v521 = vunpack.c.l.b16 %v413
        %v522 = vunpack.c.l.b16 %v414
        %v523 = vunpack.c.l.b16 %v415
        %v524 = vunpack.c.l.b16 %v416
        %v525 = vunpack.c.l.b16 %v417
        %v526 = vunpack.c.l.b16 %v418
        %v527 = vunpack.c.l.b16 %v419
        %v528 = vunpack.c.l.b16 %v420
        %v529 = vunpack.c.l.b16 %v421
        %v530 = vunpack.c.l.b16 %v422
        %v531 = vunpack.c.l.b16 %v423
        %v532 = vunpack.c.l.b16 %v424
        %v533 = vunpack.c.l.b16 %v425
        %v534 = vunpack.c.l.b16 %v426
        %v535 = vunpack.c.l.b16 %v427
        %v536 = vunpack.c.l.b16 %v428
        %v537 = vunpack.c.l.b16 %v429
        %v538 = vunpack.c.l.b16 %v430
        %v539 = vunpack.c.l.b16 %v431
        %v540 = vunpack.c.l.b16 %v432
        %v541 = vunpack.c.l.b16 %v433
        %v542 = vunpack.c.l.b16 %v434
        %v543 = vunpack.c.l.b16 %v435
        %v544 = vunpack.c.l.b16 %v436
        %v545 = vunpack.c.l.b16 %v437
        %v546 = vunpack.c.l.b16 %v438
        %v547 = vpack.c.b16 %v516, %v515
        %v548 = vpack.c.b16 %v518, %v517
        %v549 = vpack.c.b16 %v520, %v519
        %v550 = vpack.c.b16 %v522, %v521
        %v551 = vpack.c.b16 %v524, %v523
        %v552 = vpack.c.b16 %v526, %v525
        %v553 = vpack.c.b16 %v528, %v527
        %v554 = vpack.c.b16 %v530, %v529
        %v555 = vpack.c.b16 %v532, %v531
        %v556 = vpack.c.b16 %v534, %v533
        %v557 = vpack.c.b16 %v536, %v535
        %v558 = vpack.c.b16 %v538, %v537
        %v559 = vpack.c.b16 %v540, %v539
        %v560 = vpack.c.b16 %v542, %v541
        %v561 = vpack.c.b16 %v544, %v543
        %v562 = vpack.c.b16 %v546, %v545
        %579 = vmatpush.bf16.msra.mxu0 %v554
        %580 = vmatpush.bf16.msra.mxu0 %v553
        %581 = vmatpush.bf16.msra.mxu0 %v552
        %582 = vmatpush.bf16.msra.mxu0 %v551
        %583 = vmatpush.bf16.msra.mxu0 %v550
        %584 = vmatpush.bf16.msra.mxu0 %v549
        %585 = vmatpush.bf16.msra.mxu0 %v548
        %586 = vmatpush.bf16.msra.mxu0 %v547
        %587 = vmatmul.bf16.gmra.mxu0 %v467
        %v588 = vpop.f32.mrf.mxu0
        %v589 = vadd.f32 %v441, %v588
        %v590 = vpop.f32.mrf.mxu0
        %v591 = vadd.f32 %v441, %v590
        %592 = vmatmul.bf16.gmra.mxu0 %v469
        %v593 = vpop.f32.mrf.mxu0
        %v594 = vadd.f32 %v441, %v593
        %v595 = vpop.f32.mrf.mxu0
        %v596 = vadd.f32 %v441, %v595
        %597 = vmatmul.bf16.gmra.mxu0 %v471
        %v598 = vpop.f32.mrf.mxu0
        %v599 = vadd.f32 %v441, %v598
        %v600 = vpop.f32.mrf.mxu0
        %v601 = vadd.f32 %v441, %v600
        %602 = vmatmul.bf16.gmra.mxu0 %v473
        %v603 = vpop.f32.mrf.mxu0
        %v604 = vadd.f32 %v441, %v603
        %v605 = vpop.f32.mrf.mxu0
        %v606 = vadd.f32 %v441, %v605
        %607 = vdwg.mxu0
        %608 = vmatpush.bf16.msra.mxu0 %v562
        %609 = vmatpush.bf16.msra.mxu0 %v561
        %610 = vmatpush.bf16.msra.mxu0 %v560
        %611 = vmatpush.bf16.msra.mxu0 %v559
        %612 = vmatpush.bf16.msra.mxu0 %v558
        %613 = vmatpush.bf16.msra.mxu0 %v557
        %614 = vmatpush.bf16.msra.mxu0 %v556
        %615 = vmatpush.bf16.msra.mxu0 %v555
        %616 = vmatmul.bf16.gmra.mxu0 %v468
        %v617 = vpop.f32.mrf.mxu0
        %v618 = vadd.f32 %v589, %v617
        %v619 = vpop.f32.mrf.mxu0
        %v620 = vadd.f32 %v591, %v619
        %621 = vmatmul.bf16.gmra.mxu0 %v470
        %v622 = vpop.f32.mrf.mxu0
        %v623 = vadd.f32 %v594, %v622
        %v624 = vpop.f32.mrf.mxu0
        %v625 = vadd.f32 %v596, %v624
        %626 = vmatmul.bf16.gmra.mxu0 %v472
        %v627 = vpop.f32.mrf.mxu0
        %v628 = vadd.f32 %v599, %v627
        %v629 = vpop.f32.mrf.mxu0
        %v630 = vadd.f32 %v601, %v629
        %631 = vmatmul.bf16.gmra.mxu0 %v474
        %v632 = vpop.f32.mrf.mxu0
        %v633 = vadd.f32 %v604, %v632
        %v634 = vpop.f32.mrf.mxu0
        %v635 = vadd.f32 %v606, %v634
        %636 = vdwg.mxu0
        %639 = vrot.lane.b32.xlu0 %v618, 96
        %v640 = vpop.permute.xlu0 %639
        %641 = vrot.lane.b32.xlu0 %v620, 96
        %v642 = vpop.permute.xlu0 %641
        %vm643 = vcmask 261120
        %v644 = vsel %vm643, %v618, 0
        %v646 = vsel %vm643, %v620, 0
        %v648 = vsel %vm643, %v640, 0
        %v650 = vsel %vm643, %v642, 0
        %652 = vmatpush.xpose.msra.mxu0 0.0
        %653 = vmatpush.xpose.msra.mxu0 0.0
        %654 = vmatpush.xpose.msra.mxu0 0.0
        %655 = vmatpush.xpose.msra.mxu0 0.0
        %656 = vmatpush.xpose.msra.mxu0 0.0
        %657 = vmatpush.xpose.msra.mxu0 0.0
        %658 = vmatpush.xpose.msra.mxu0 0.0
        %659 = vmatpush.xpose.msra.mxu0 0.0
        %660 = vmatpush.xpose.msra.mxu0 0.0
        %661 = vmatpush.xpose.msra.mxu0 0.0
        %662 = vmatpush.xpose.msra.mxu0 0.0
        %663 = vmatpush.xpose.msra.mxu0 0.0
        %664 = vmatpush.xpose.msra.mxu0 0.0
        %665 = vmatpush.xpose.msra.mxu0 0.0
        %666 = vmatpush.xpose.msra.mxu0 %v650
        %667 = vmatpush.xpose.msra.mxu0 %v648
        %668 = vmatmul.f32.gmra.mxu0 %v644
        %v669 = vpop.f32.mrf.mxu0
        %v670 = vadd.f32 0.0, %v669
        %671 = vmatmul.f32.gmra.mxu0 %v646
        %v672 = vpop.f32.mrf.mxu0
        %v673 = vadd.f32 0.0, %v672
        %674 = vdwg.mxu0
        %677 = vrot.lane.b32.xlu0 %v623, 96
        %v678 = vpop.permute.xlu0 %677
        %679 = vrot.lane.b32.xlu0 %v625, 96
        %v680 = vpop.permute.xlu0 %679
        %v681 = vsel %vm643, %v623, 0
        %v683 = vsel %vm643, %v625, 0
        %v685 = vsel %vm643, %v678, 0
        %v687 = vsel %vm643, %v680, 0
        %689 = vmatpush.xpose.msra.mxu0 0.0
        %690 = vmatpush.xpose.msra.mxu0 0.0
        %691 = vmatpush.xpose.msra.mxu0 0.0
        %692 = vmatpush.xpose.msra.mxu0 0.0
        %693 = vmatpush.xpose.msra.mxu0 0.0
        %694 = vmatpush.xpose.msra.mxu0 0.0
        %695 = vmatpush.xpose.msra.mxu0 0.0
        %696 = vmatpush.xpose.msra.mxu0 0.0
        %697 = vmatpush.xpose.msra.mxu0 0.0
        %698 = vmatpush.xpose.msra.mxu0 0.0
        %699 = vmatpush.xpose.msra.mxu0 0.0
        %700 = vmatpush.xpose.msra.mxu0 0.0
        %701 = vmatpush.xpose.msra.mxu0 0.0
        %702 = vmatpush.xpose.msra.mxu0 0.0
        %703 = vmatpush.xpose.msra.mxu0 %v687
        %704 = vmatpush.xpose.msra.mxu0 %v685
        %705 = vmatmul.f32.gmra.mxu0 %v681
        %v706 = vpop.f32.mrf.mxu0
        %v707 = vadd.f32 0.0, %v706
        %708 = vmatmul.f32.gmra.mxu0 %v683
        %v709 = vpop.f32.mrf.mxu0
        %v710 = vadd.f32 0.0, %v709
        %711 = vdwg.mxu0
        %714 = vrot.lane.b32.xlu0 %v628, 96
        %v715 = vpop.permute.xlu0 %714
        %716 = vrot.lane.b32.xlu0 %v630, 96
        %v717 = vpop.permute.xlu0 %716
        %v718 = vsel %vm643, %v628, 0
        %v720 = vsel %vm643, %v630, 0
        %v722 = vsel %vm643, %v715, 0
        %v724 = vsel %vm643, %v717, 0
        %726 = vmatpush.xpose.msra.mxu0 0.0
        %727 = vmatpush.xpose.msra.mxu0 0.0
        %728 = vmatpush.xpose.msra.mxu0 0.0
        %729 = vmatpush.xpose.msra.mxu0 0.0
        %730 = vmatpush.xpose.msra.mxu0 0.0
        %731 = vmatpush.xpose.msra.mxu0 0.0
        %732 = vmatpush.xpose.msra.mxu0 0.0
        %733 = vmatpush.xpose.msra.mxu0 0.0
        %734 = vmatpush.xpose.msra.mxu0 0.0
        %735 = vmatpush.xpose.msra.mxu0 0.0
        %736 = vmatpush.xpose.msra.mxu0 0.0
        %737 = vmatpush.xpose.msra.mxu0 0.0
        %738 = vmatpush.xpose.msra.mxu0 0.0
        %739 = vmatpush.xpose.msra.mxu0 0.0
        %740 = vmatpush.xpose.msra.mxu0 %v724
        %741 = vmatpush.xpose.msra.mxu0 %v722
        %742 = vmatmul.f32.gmra.mxu0 %v718
        %v743 = vpop.f32.mrf.mxu0
        %v744 = vadd.f32 0.0, %v743
        %745 = vmatmul.f32.gmra.mxu0 %v720
        %v746 = vpop.f32.mrf.mxu0
        %v747 = vadd.f32 0.0, %v746
        %748 = vdwg.mxu0
        %751 = vrot.lane.b32.xlu0 %v633, 96
        %v752 = vpop.permute.xlu0 %751
        %753 = vrot.lane.b32.xlu0 %v635, 96
        %v754 = vpop.permute.xlu0 %753
        %v755 = vsel %vm643, %v633, 0
        %v757 = vsel %vm643, %v635, 0
        %v759 = vsel %vm643, %v752, 0
        %v761 = vsel %vm643, %v754, 0
        %763 = vmatpush.xpose.msra.mxu0 0.0
        %764 = vmatpush.xpose.msra.mxu0 0.0
        %765 = vmatpush.xpose.msra.mxu0 0.0
        %766 = vmatpush.xpose.msra.mxu0 0.0
        %767 = vmatpush.xpose.msra.mxu0 0.0
        %768 = vmatpush.xpose.msra.mxu0 0.0
        %769 = vmatpush.xpose.msra.mxu0 0.0
        %770 = vmatpush.xpose.msra.mxu0 0.0
        %771 = vmatpush.xpose.msra.mxu0 0.0
        %772 = vmatpush.xpose.msra.mxu0 0.0
        %773 = vmatpush.xpose.msra.mxu0 0.0
        %774 = vmatpush.xpose.msra.mxu0 0.0
        %775 = vmatpush.xpose.msra.mxu0 0.0
        %776 = vmatpush.xpose.msra.mxu0 0.0
        %777 = vmatpush.xpose.msra.mxu0 %v761
        %778 = vmatpush.xpose.msra.mxu0 %v759
        %779 = vmatmul.f32.gmra.mxu0 %v755
        %v780 = vpop.f32.mrf.mxu0
        %v781 = vadd.f32 0.0, %v780
        %782 = vmatmul.f32.gmra.mxu0 %v757
        %v783 = vpop.f32.mrf.mxu0
        %v784 = vadd.f32 0.0, %v783
        %785 = vdwg.mxu0
        %v786 = vlaneseq
        %v787 = vand.u32 %v786, 127
        %vm788 = vcmp.lt.s32.totalorder %v787, 9
        %v789 = vsel %vm788, 1, 0
        %vm790 = vcmp.eq.s32.totalorder %v789, 1
        %v791 = vsel %vm790, %v670, -1e+30
        %v792 = vsel %vm790, %v673, -1e+30
        %v793 = vsel %vm790, %v707, -1e+30
        %v794 = vsel %vm790, %v710, -1e+30
        %v795 = vsel %vm790, %v744, -1e+30
        %v796 = vsel %vm790, %v747, -1e+30
        %v797 = vsel %vm790, %v781, -1e+30
        %v798 = vsel %vm790, %v784, -1e+30
        %vm799 = vcmask 130048
        %v800 = vsel %vm799, %v791, -inf
        %801 = vmax.xlane.f32.xlu0 %v800
        %v802 = vpop.xlane.xlu0 %801
        %v803 = vsel %vm799, %v792, -inf
        %804 = vmax.xlane.f32.xlu0 %v803
        %v805 = vpop.xlane.xlu0 %804
        %v806 = vsel %vm799, %v793, -inf
        %807 = vmax.xlane.f32.xlu0 %v806
        %v808 = vpop.xlane.xlu0 %807
        %v809 = vsel %vm799, %v794, -inf
        %810 = vmax.xlane.f32.xlu0 %v809
        %v811 = vpop.xlane.xlu0 %810
        %v812 = vsel %vm799, %v795, -inf
        %813 = vmax.xlane.f32.xlu0 %v812
        %v814 = vpop.xlane.xlu0 %813
        %v815 = vsel %vm799, %v796, -inf
        %816 = vmax.xlane.f32.xlu0 %v815
        %v817 = vpop.xlane.xlu0 %816
        %v818 = vsel %vm799, %v797, -inf
        %819 = vmax.xlane.f32.xlu0 %v818
        %v820 = vpop.xlane.xlu0 %819
        %v821 = vsel %vm799, %v798, -inf
        %822 = vmax.xlane.f32.xlu0 %v821
        %v823 = vpop.xlane.xlu0 %822
        %v824 = vsub.f32 %v791, %v802
        %v825 = vsub.f32 %v792, %v805
        %v826 = vsub.f32 %v793, %v808
        %v827 = vsub.f32 %v794, %v811
        %v828 = vsub.f32 %v795, %v814
        %v829 = vsub.f32 %v796, %v817
        %v830 = vsub.f32 %v797, %v820
        %v831 = vsub.f32 %v798, %v823
        %v832 = vmul.f32 %v824, 1.442695
        %v833 = vpow.pop %v832
        %v834 = vmul.f32 %v825, 1.442695
        %v835 = vpow.pop %v834
        %v836 = vmul.f32 %v826, 1.442695
        %v837 = vpow.pop %v836
        %v838 = vmul.f32 %v827, 1.442695
        %v839 = vpow.pop %v838
        %v840 = vmul.f32 %v828, 1.442695
        %v841 = vpow.pop %v840
        %v842 = vmul.f32 %v829, 1.442695
        %v843 = vpow.pop %v842
        %v844 = vmul.f32 %v830, 1.442695
        %v845 = vpow.pop %v844
        %v846 = vmul.f32 %v831, 1.442695
        %v847 = vpow.pop %v846
        %v848 = vsel %vm799, %v833, 0.0
        %849 = vadd.xlane.f32.xlu0 %v848
        %v850 = vpop.xlane.xlu0 %849
        %v851 = vsel %vm799, %v835, 0.0
        %852 = vadd.xlane.f32.xlu0 %v851
        %v853 = vpop.xlane.xlu0 %852
        %v854 = vsel %vm799, %v837, 0.0
        %855 = vadd.xlane.f32.xlu0 %v854
        %v856 = vpop.xlane.xlu0 %855
        %v857 = vsel %vm799, %v839, 0.0
        %858 = vadd.xlane.f32.xlu0 %v857
        %v859 = vpop.xlane.xlu0 %858
        %v860 = vsel %vm799, %v841, 0.0
        %861 = vadd.xlane.f32.xlu0 %v860
        %v862 = vpop.xlane.xlu0 %861
        %v863 = vsel %vm799, %v843, 0.0
        %864 = vadd.xlane.f32.xlu0 %v863
        %v865 = vpop.xlane.xlu0 %864
        %v866 = vsel %vm799, %v845, 0.0
        %867 = vadd.xlane.f32.xlu0 %v866
        %v868 = vpop.xlane.xlu0 %867
        %v869 = vsel %vm799, %v847, 0.0
        %870 = vadd.xlane.f32.xlu0 %v869
        %v871 = vpop.xlane.xlu0 %870
        %v872 = vrcp.pop %v850
        %v873 = vrcp.pop %v853
        %v874 = vrcp.pop %v856
        %v875 = vrcp.pop %v859
        %v876 = vrcp.pop %v862
        %v877 = vrcp.pop %v865
        %v878 = vrcp.pop %v868
        %v879 = vrcp.pop %v871
        %v880 = vmul.f32 %v833, %v872
        %v881 = vmul.f32 %v835, %v873
        %v882 = vmul.f32 %v837, %v874
        %v883 = vmul.f32 %v839, %v875
        %v884 = vmul.f32 %v841, %v876
        %v885 = vmul.f32 %v843, %v877
        %v886 = vmul.f32 %v845, %v878
        %v887 = vmul.f32 %v847, %v879
        %v888 = vlaneseq
        %v889 = vshrl.u32 %v888, 7
        %v890 = vadd.s32 %v889, 8
        %vm891 = vcmp.lt.s32.totalorder %v889, 9
        %vm892 = vcmp.lt.s32.totalorder %v890, 9
        %v893 = vsel %vm891, 1, 0
        %v894 = vsel %vm892, 1, 0
        %vm895 = vcmp.eq.s32.totalorder %v893, 1
        %vm896 = vcmp.eq.s32.totalorder %v894, 1
        %v897 = vsel %vm895, %v880, 0.0
        %v898 = vsel %vm896, %v881, 0.0
        %v899 = vsel %vm895, %v882, 0.0
        %v900 = vsel %vm896, %v883, 0.0
        %v901 = vsel %vm895, %v884, 0.0
        %v902 = vsel %vm896, %v885, 0.0
        %v903 = vsel %vm895, %v886, 0.0
        %v904 = vsel %vm896, %v887, 0.0
        %v905 = vsel %vm799, %v897, 0.0
        %v906 = vsel %vm799, %v898, 0.0
        %v907 = vadd.f32 %v905, %v906
        %v908 = vrot.slane %v907, 4
        %v909 = vadd.f32 %v907, %v908
        %v910 = vrot.slane %v909, 2
        %v911 = vadd.f32 %v909, %v910
        %v912 = vrot.slane %v911, 1
        %v913 = vadd.f32 %v911, %v912
        %v914 = vsel %vm799, %v899, 0.0
        %v915 = vsel %vm799, %v900, 0.0
        %v916 = vadd.f32 %v914, %v915
        %v917 = vrot.slane %v916, 4
        %v918 = vadd.f32 %v916, %v917
        %v919 = vrot.slane %v918, 2
        %v920 = vadd.f32 %v918, %v919
        %v921 = vrot.slane %v920, 1
        %v922 = vadd.f32 %v920, %v921
        %v923 = vsel %vm799, %v901, 0.0
        %v924 = vsel %vm799, %v902, 0.0
        %v925 = vadd.f32 %v923, %v924
        %v926 = vrot.slane %v925, 4
        %v927 = vadd.f32 %v925, %v926
        %v928 = vrot.slane %v927, 2
        %v929 = vadd.f32 %v927, %v928
        %v930 = vrot.slane %v929, 1
        %v931 = vadd.f32 %v929, %v930
        %v932 = vsel %vm799, %v903, 0.0
        %v933 = vsel %vm799, %v904, 0.0
        %v934 = vadd.f32 %v932, %v933
        %v935 = vrot.slane %v934, 4
        %v936 = vadd.f32 %v934, %v935
        %v937 = vrot.slane %v936, 2
        %v938 = vadd.f32 %v936, %v937
        %v939 = vrot.slane %v938, 1
        %v940 = vadd.f32 %v938, %v939
        %v941 = vmul.f32 %v913, 0.11111111
        %v942 = vmul.f32 %v922, 0.11111111
        %v943 = vmul.f32 %v931, 0.11111111
        %v944 = vmul.f32 %v940, 0.11111111
        %v945 = vlaneseq
        %v946 = vshrl.u32 %v945, 7
        %948 = vset.pattern.permute.xlu0 %v946
        %949 = vperm.xlu0 %948, %v941
        %v950 = vpop.permute.xlu0 %949
        %v951 = vlaneseq
        %v952 = vshrl.u32 %v951, 7
        %v953 = vadd.s32 %v952, 8
        %954 = vset.pattern.permute.xlu0 %v953
        %955 = vperm.xlu0 %954, %v941
        %v956 = vpop.permute.xlu0 %955
        %v957 = vlaneseq
        %v958 = vshrl.u32 %v957, 7
        %960 = vset.pattern.permute.xlu0 %v958
        %961 = vperm.xlu0 %960, %v942
        %v962 = vpop.permute.xlu0 %961
        %v963 = vlaneseq
        %v964 = vshrl.u32 %v963, 7
        %v965 = vadd.s32 %v964, 8
        %966 = vset.pattern.permute.xlu0 %v965
        %967 = vperm.xlu0 %966, %v942
        %v968 = vpop.permute.xlu0 %967
        %v969 = vlaneseq
        %v970 = vshrl.u32 %v969, 7
        %972 = vset.pattern.permute.xlu0 %v970
        %973 = vperm.xlu0 %972, %v943
        %v974 = vpop.permute.xlu0 %973
        %v975 = vlaneseq
        %v976 = vshrl.u32 %v975, 7
        %v977 = vadd.s32 %v976, 8
        %978 = vset.pattern.permute.xlu0 %v977
        %979 = vperm.xlu0 %978, %v943
        %v980 = vpop.permute.xlu0 %979
        %v981 = vlaneseq
        %v982 = vshrl.u32 %v981, 7
        %984 = vset.pattern.permute.xlu0 %v982
        %985 = vperm.xlu0 %984, %v944
        %v986 = vpop.permute.xlu0 %985
        %v987 = vlaneseq
        %v988 = vshrl.u32 %v987, 7
        %v989 = vadd.s32 %v988, 8
        %990 = vset.pattern.permute.xlu0 %v989
        %991 = vperm.xlu0 %990, %v944
        %v992 = vpop.permute.xlu0 %991
        %v993 = vunpack.c.l.bf16 %v399
        %v994 = vunpack.c.h.bf16 %v399
        %v995 = vunpack.c.l.bf16 %v400
        %v996 = vunpack.c.h.bf16 %v400
        %v997 = vunpack.c.l.bf16 %v401
        %v998 = vunpack.c.h.bf16 %v401
        %v999 = vunpack.c.l.bf16 %v402
        %v1000 = vunpack.c.h.bf16 %v402
        %v1001 = vunpack.c.l.bf16 %v403
        %v1002 = vunpack.c.h.bf16 %v403
        %v1003 = vunpack.c.l.bf16 %v404
        %v1004 = vunpack.c.h.bf16 %v404
        %v1005 = vunpack.c.l.bf16 %v405
        %v1006 = vunpack.c.h.bf16 %v405
        %v1007 = vunpack.c.l.bf16 %v406
        %v1008 = vunpack.c.h.bf16 %v406
        %v1009 = vmul.f32 %v950, %v993
        %v1010 = vmul.f32 %v950, %v994
        %v1011 = vmul.f32 %v956, %v995
        %v1012 = vmul.f32 %v956, %v996
        %v1013 = vmul.f32 %v962, %v997
        %v1014 = vmul.f32 %v962, %v998
        %v1015 = vmul.f32 %v968, %v999
        %v1016 = vmul.f32 %v968, %v1000
        %v1017 = vmul.f32 %v974, %v1001
        %v1018 = vmul.f32 %v974, %v1002
        %v1019 = vmul.f32 %v980, %v1003
        %v1020 = vmul.f32 %v980, %v1004
        %v1021 = vmul.f32 %v986, %v1005
        %v1022 = vmul.f32 %v986, %v1006
        %v1023 = vmul.f32 %v992, %v1007
        %v1024 = vmul.f32 %v992, %v1008
        %v1025 = vadd.f32 %v1009, %v1011
        %v1026 = vrot.slane %v1025, 4
        %v1027 = vadd.f32 %v1025, %v1026
        %v1028 = vrot.slane %v1027, 2
        %v1029 = vadd.f32 %v1027, %v1028
        %v1030 = vrot.slane %v1029, 1
        %v1031 = vadd.f32 %v1029, %v1030
        %v1032 = vadd.f32 %v1010, %v1012
        %v1033 = vrot.slane %v1032, 4
        %v1034 = vadd.f32 %v1032, %v1033
        %v1035 = vrot.slane %v1034, 2
        %v1036 = vadd.f32 %v1034, %v1035
        %v1037 = vrot.slane %v1036, 1
        %v1038 = vadd.f32 %v1036, %v1037
        %v1039 = vadd.f32 %v1013, %v1015
        %v1040 = vrot.slane %v1039, 4
        %v1041 = vadd.f32 %v1039, %v1040
        %v1042 = vrot.slane %v1041, 2
        %v1043 = vadd.f32 %v1041, %v1042
        %v1044 = vrot.slane %v1043, 1
        %v1045 = vadd.f32 %v1043, %v1044
        %v1046 = vadd.f32 %v1014, %v1016
        %v1047 = vrot.slane %v1046, 4
        %v1048 = vadd.f32 %v1046, %v1047
        %v1049 = vrot.slane %v1048, 2
        %v1050 = vadd.f32 %v1048, %v1049
        %v1051 = vrot.slane %v1050, 1
        %v1052 = vadd.f32 %v1050, %v1051
        %v1053 = vadd.f32 %v1017, %v1019
        %v1054 = vrot.slane %v1053, 4
        %v1055 = vadd.f32 %v1053, %v1054
        %v1056 = vrot.slane %v1055, 2
        %v1057 = vadd.f32 %v1055, %v1056
        %v1058 = vrot.slane %v1057, 1
        %v1059 = vadd.f32 %v1057, %v1058
        %v1060 = vadd.f32 %v1018, %v1020
        %v1061 = vrot.slane %v1060, 4
        %v1062 = vadd.f32 %v1060, %v1061
        %v1063 = vrot.slane %v1062, 2
        %v1064 = vadd.f32 %v1062, %v1063
        %v1065 = vrot.slane %v1064, 1
        %v1066 = vadd.f32 %v1064, %v1065
        %v1067 = vadd.f32 %v1021, %v1023
        %v1068 = vrot.slane %v1067, 4
        %v1069 = vadd.f32 %v1067, %v1068
        %v1070 = vrot.slane %v1069, 2
        %v1071 = vadd.f32 %v1069, %v1070
        %v1072 = vrot.slane %v1071, 1
        %v1073 = vadd.f32 %v1071, %v1072
        %v1074 = vadd.f32 %v1022, %v1024
        %v1075 = vrot.slane %v1074, 4
        %v1076 = vadd.f32 %v1074, %v1075
        %v1077 = vrot.slane %v1076, 2
        %v1078 = vadd.f32 %v1076, %v1077
        %v1079 = vrot.slane %v1078, 1
        %v1080 = vadd.f32 %v1078, %v1079
        %v1081 = vpack.c.bf16 %v1031, %v1031
        %v1082 = vpack.c.bf16 %v1038, %v1038
        %v1083 = vpack.c.bf16 %v1045, %v1045
        %v1084 = vpack.c.bf16 %v1052, %v1052
        %v1085 = vpack.c.bf16 %v1059, %v1059
        %v1086 = vpack.c.bf16 %v1066, %v1066
        %v1087 = vpack.c.bf16 %v1073, %v1073
        %v1088 = vpack.c.bf16 %v1080, %v1080
        %v1089 = vld [vmem:[#allocation4] sm:$0xff]
        %v1090 = vld [vmem:[#allocation4 + $0x8] sm:$0xff]
        %v1091 = vld [vmem:[#allocation4 + $0x10] sm:$0xff]
        %v1092 = vld [vmem:[#allocation4 + $0x18] sm:$0xff]
        %v1093 = vld [vmem:[#allocation4 + $0x20] sm:$0xff]
        %v1094 = vld [vmem:[#allocation4 + $0x28] sm:$0xff]
        %v1095 = vld [vmem:[#allocation4 + $0x30] sm:$0xff]
        %v1096 = vld [vmem:[#allocation4 + $0x38] sm:$0xff]
        %v1097 = vld [vmem:[#allocation4 + $0x40] sm:$0xff]
        %v1098 = vld [vmem:[#allocation4 + $0x48] sm:$0xff]
        %v1099 = vld [vmem:[#allocation4 + $0x50] sm:$0xff]
        %v1100 = vld [vmem:[#allocation4 + $0x58] sm:$0xff]
        %v1101 = vld [vmem:[#allocation4 + $0x60] sm:$0xff]
        %v1102 = vld [vmem:[#allocation4 + $0x68] sm:$0xff]
        %v1103 = vld [vmem:[#allocation4 + $0x70] sm:$0xff]
        %v1104 = vld [vmem:[#allocation4 + $0x78] sm:$0xff]
        %v1105 = vld [vmem:[#allocation4 + $0x80] sm:$0xff]
        %v1106 = vld [vmem:[#allocation4 + $0x88] sm:$0xff]
        %v1107 = vld [vmem:[#allocation4 + $0x90] sm:$0xff]
        %v1108 = vld [vmem:[#allocation4 + $0x98] sm:$0xff]
        %v1109 = vld [vmem:[#allocation4 + $0xa0] sm:$0xff]
        %v1110 = vld [vmem:[#allocation4 + $0xa8] sm:$0xff]
        %v1111 = vld [vmem:[#allocation4 + $0xb0] sm:$0xff]
        %v1112 = vld [vmem:[#allocation4 + $0xb8] sm:$0xff]
        %v1113 = vld [vmem:[#allocation4 + $0xc0] sm:$0xff]
        %v1114 = vld [vmem:[#allocation4 + $0xc8] sm:$0xff]
        %v1115 = vld [vmem:[#allocation4 + $0xd0] sm:$0xff]
        %v1116 = vld [vmem:[#allocation4 + $0xd8] sm:$0xff]
        %v1117 = vld [vmem:[#allocation4 + $0xe0] sm:$0xff]
        %v1118 = vld [vmem:[#allocation4 + $0xe8] sm:$0xff]
        %v1119 = vld [vmem:[#allocation4 + $0xf0] sm:$0xff]
        %v1120 = vld [vmem:[#allocation4 + $0xf8] sm:$0xff]
        %v1121 = vld [vmem:[%s4] sm:$0x3]
        %v1123 = vperm.slane %v1121, 0
        %v1124 = vperm.slane %v1121, 1
        %v1135 = vunpack.c.l.b16 %v1081
        %v1136 = vunpack.c.l.b16 %v1082
        %v1137 = vunpack.c.l.b16 %v1083
        %v1138 = vunpack.c.l.b16 %v1084
        %v1139 = vunpack.c.l.b16 %v1085
        %v1140 = vunpack.c.l.b16 %v1086
        %v1141 = vunpack.c.l.b16 %v1087
        %v1142 = vunpack.c.l.b16 %v1088
        %vm1143 = vcmask 1041409
        %v1144 = vsel %vm1143, %v1137, %v1135
        %vm1145 = vcmask 1042434
        %v1146 = vsel %vm1145, %v1139, %v1144
        %vm1147 = vcmask 1043459
        %v1148 = vsel %vm1147, %v1141, %v1146
        %v1149 = vsel %vm1143, %v1138, %v1136
        %v1150 = vsel %vm1145, %v1140, %v1149
        %v1151 = vsel %vm1147, %v1142, %v1150
        %v1152 = vpack.c.b16 %v1148, %v1148
        %v1153 = vpack.c.b16 %v1151, %v1151
        %v1188 = vunpack.c.l.b16 %v1089
        %v1189 = vunpack.c.h.b16 %v1089
        %v1190 = vunpack.c.l.b16 %v1090
        %v1191 = vunpack.c.h.b16 %v1090
        %v1192 = vunpack.c.l.b16 %v1091
        %v1193 = vunpack.c.h.b16 %v1091
        %v1194 = vunpack.c.l.b16 %v1092
        %v1195 = vunpack.c.h.b16 %v1092
        %v1196 = vunpack.c.l.b16 %v1093
        %v1197 = vunpack.c.h.b16 %v1093
        %v1198 = vunpack.c.l.b16 %v1094
        %v1199 = vunpack.c.h.b16 %v1094
        %v1200 = vunpack.c.l.b16 %v1095
        %v1201 = vunpack.c.h.b16 %v1095
        %v1202 = vunpack.c.l.b16 %v1096
        %v1203 = vunpack.c.h.b16 %v1096
        %v1204 = vunpack.c.l.b16 %v1097
        %v1205 = vunpack.c.h.b16 %v1097
        %v1206 = vunpack.c.l.b16 %v1098
        %v1207 = vunpack.c.h.b16 %v1098
        %v1208 = vunpack.c.l.b16 %v1099
        %v1209 = vunpack.c.h.b16 %v1099
        %v1210 = vunpack.c.l.b16 %v1100
        %v1211 = vunpack.c.h.b16 %v1100
        %v1212 = vunpack.c.l.b16 %v1101
        %v1213 = vunpack.c.h.b16 %v1101
        %v1214 = vunpack.c.l.b16 %v1102
        %v1215 = vunpack.c.h.b16 %v1102
        %v1216 = vunpack.c.l.b16 %v1103
        %v1217 = vunpack.c.h.b16 %v1103
        %v1218 = vunpack.c.l.b16 %v1104
        %v1219 = vunpack.c.h.b16 %v1104
        %v1220 = vunpack.c.l.b16 %v1105
        %v1221 = vunpack.c.h.b16 %v1105
        %v1222 = vunpack.c.l.b16 %v1106
        %v1223 = vunpack.c.h.b16 %v1106
        %v1224 = vunpack.c.l.b16 %v1107
        %v1225 = vunpack.c.h.b16 %v1107
        %v1226 = vunpack.c.l.b16 %v1108
        %v1227 = vunpack.c.h.b16 %v1108
        %v1228 = vunpack.c.l.b16 %v1109
        %v1229 = vunpack.c.h.b16 %v1109
        %v1230 = vunpack.c.l.b16 %v1110
        %v1231 = vunpack.c.h.b16 %v1110
        %v1232 = vunpack.c.l.b16 %v1111
        %v1233 = vunpack.c.h.b16 %v1111
        %v1234 = vunpack.c.l.b16 %v1112
        %v1235 = vunpack.c.h.b16 %v1112
        %v1236 = vunpack.c.l.b16 %v1113
        %v1237 = vunpack.c.h.b16 %v1113
        %v1238 = vunpack.c.l.b16 %v1114
        %v1239 = vunpack.c.h.b16 %v1114
        %v1240 = vunpack.c.l.b16 %v1115
        %v1241 = vunpack.c.h.b16 %v1115
        %v1242 = vunpack.c.l.b16 %v1116
        %v1243 = vunpack.c.h.b16 %v1116
        %v1244 = vunpack.c.l.b16 %v1117
        %v1245 = vunpack.c.h.b16 %v1117
        %v1246 = vunpack.c.l.b16 %v1118
        %v1247 = vunpack.c.h.b16 %v1118
        %v1248 = vunpack.c.l.b16 %v1119
        %v1249 = vunpack.c.h.b16 %v1119
        %v1250 = vunpack.c.l.b16 %v1120
        %v1251 = vunpack.c.h.b16 %v1120
        %v1252 = vpack.c.b16 %v1190, %v1188
        %v1253 = vpack.c.b16 %v1191, %v1189
        %v1254 = vpack.c.b16 %v1194, %v1192
        %v1255 = vpack.c.b16 %v1195, %v1193
        %v1256 = vpack.c.b16 %v1198, %v1196
        %v1257 = vpack.c.b16 %v1199, %v1197
        %v1258 = vpack.c.b16 %v1202, %v1200
        %v1259 = vpack.c.b16 %v1203, %v1201
        %v1260 = vpack.c.b16 %v1206, %v1204
        %v1261 = vpack.c.b16 %v1207, %v1205
        %v1262 = vpack.c.b16 %v1210, %v1208
        %v1263 = vpack.c.b16 %v1211, %v1209
        %v1264 = vpack.c.b16 %v1214, %v1212
        %v1265 = vpack.c.b16 %v1215, %v1213
        %v1266 = vpack.c.b16 %v1218, %v1216
        %v1267 = vpack.c.b16 %v1219, %v1217
        %v1268 = vpack.c.b16 %v1222, %v1220
        %v1269 = vpack.c.b16 %v1223, %v1221
        %v1270 = vpack.c.b16 %v1226, %v1224
        %v1271 = vpack.c.b16 %v1227, %v1225
        %v1272 = vpack.c.b16 %v1230, %v1228
        %v1273 = vpack.c.b16 %v1231, %v1229
        %v1274 = vpack.c.b16 %v1234, %v1232
        %v1275 = vpack.c.b16 %v1235, %v1233
        %v1276 = vpack.c.b16 %v1238, %v1236
        %v1277 = vpack.c.b16 %v1239, %v1237
        %v1278 = vpack.c.b16 %v1242, %v1240
        %v1279 = vpack.c.b16 %v1243, %v1241
        %v1280 = vpack.c.b16 %v1246, %v1244
        %v1281 = vpack.c.b16 %v1247, %v1245
        %v1282 = vpack.c.b16 %v1250, %v1248
        %v1283 = vpack.c.b16 %v1251, %v1249
        %1316 = vmatpush.bf16.msra.mxu0 %v1266
        %1317 = vmatpush.bf16.msra.mxu0 %v1264
        %1318 = vmatpush.bf16.msra.mxu0 %v1262
        %1319 = vmatpush.bf16.msra.mxu0 %v1260
        %1320 = vmatpush.bf16.msra.mxu0 %v1258
        %1321 = vmatpush.bf16.msra.mxu0 %v1256
        %1322 = vmatpush.bf16.msra.mxu0 %v1254
        %1323 = vmatpush.bf16.msra.mxu0 %v1252
        %1324 = vmatmul.bf16.gmra.mxu0 %v1152
        %v1325 = vpop.f32.mrf.mxu0
        %v1326 = vadd.f32 %v1123, %v1325
        %v1327 = vpop.f32.mrf.mxu0
        %1328 = vdwg.mxu0
        %1329 = vmatpush.bf16.msra.mxu0 %v1282
        %1330 = vmatpush.bf16.msra.mxu0 %v1280
        %1331 = vmatpush.bf16.msra.mxu0 %v1278
        %1332 = vmatpush.bf16.msra.mxu0 %v1276
        %1333 = vmatpush.bf16.msra.mxu0 %v1274
        %1334 = vmatpush.bf16.msra.mxu0 %v1272
        %1335 = vmatpush.bf16.msra.mxu0 %v1270
        %1336 = vmatpush.bf16.msra.mxu0 %v1268
        %1337 = vmatmul.bf16.gmra.mxu0 %v1153
        %v1338 = vpop.f32.mrf.mxu0
        %v1339 = vadd.f32 %v1326, %v1338
        %v1340 = vpop.f32.mrf.mxu0
        %1341 = vdwg.mxu0
        %1342 = vmatpush.bf16.msra.mxu0 %v1267
        %1343 = vmatpush.bf16.msra.mxu0 %v1265
        %1344 = vmatpush.bf16.msra.mxu0 %v1263
        %1345 = vmatpush.bf16.msra.mxu0 %v1261
        %1346 = vmatpush.bf16.msra.mxu0 %v1259
        %1347 = vmatpush.bf16.msra.mxu0 %v1257
        %1348 = vmatpush.bf16.msra.mxu0 %v1255
        %1349 = vmatpush.bf16.msra.mxu0 %v1253
        %1350 = vmatmul.bf16.gmra.mxu0 %v1152
        %v1351 = vpop.f32.mrf.mxu0
        %v1352 = vadd.f32 %v1124, %v1351
        %v1353 = vpop.f32.mrf.mxu0
        %1354 = vdwg.mxu0
        %1355 = vmatpush.bf16.msra.mxu0 %v1283
        %1356 = vmatpush.bf16.msra.mxu0 %v1281
        %1357 = vmatpush.bf16.msra.mxu0 %v1279
        %1358 = vmatpush.bf16.msra.mxu0 %v1277
        %1359 = vmatpush.bf16.msra.mxu0 %v1275
        %1360 = vmatpush.bf16.msra.mxu0 %v1273
        %1361 = vmatpush.bf16.msra.mxu0 %v1271
        %1362 = vmatpush.bf16.msra.mxu0 %v1269
        %1363 = vmatmul.bf16.gmra.mxu0 %v1153
        %v1364 = vpop.f32.mrf.mxu0
        %v1365 = vadd.f32 %v1352, %v1364
        %v1366 = vpop.f32.mrf.mxu0
        %1367 = vdwg.mxu0
        %v1368 = vadd.f32 %v993, %v995
        %v1369 = vrot.slane %v1368, 4
        %v1370 = vadd.f32 %v1368, %v1369
        %v1371 = vrot.slane %v1370, 2
        %v1372 = vadd.f32 %v1370, %v1371
        %v1373 = vrot.slane %v1372, 1
        %v1374 = vadd.f32 %v1372, %v1373
        %v1375 = vadd.f32 %v994, %v996
        %v1376 = vrot.slane %v1375, 4
        %v1377 = vadd.f32 %v1375, %v1376
        %v1378 = vrot.slane %v1377, 2
        %v1379 = vadd.f32 %v1377, %v1378
        %v1380 = vrot.slane %v1379, 1
        %v1381 = vadd.f32 %v1379, %v1380
        %v1382 = vadd.f32 %v997, %v999
        %v1383 = vrot.slane %v1382, 4
        %v1384 = vadd.f32 %v1382, %v1383
        %v1385 = vrot.slane %v1384, 2
        %v1386 = vadd.f32 %v1384, %v1385
        %v1387 = vrot.slane %v1386, 1
        %v1388 = vadd.f32 %v1386, %v1387
        %v1389 = vadd.f32 %v998, %v1000
        %v1390 = vrot.slane %v1389, 4
        %v1391 = vadd.f32 %v1389, %v1390
        %v1392 = vrot.slane %v1391, 2
        %v1393 = vadd.f32 %v1391, %v1392
        %v1394 = vrot.slane %v1393, 1
        %v1395 = vadd.f32 %v1393, %v1394
        %v1396 = vadd.f32 %v1001, %v1003
        %v1397 = vrot.slane %v1396, 4
        %v1398 = vadd.f32 %v1396, %v1397
        %v1399 = vrot.slane %v1398, 2
        %v1400 = vadd.f32 %v1398, %v1399
        %v1401 = vrot.slane %v1400, 1
        %v1402 = vadd.f32 %v1400, %v1401
        %v1403 = vadd.f32 %v1002, %v1004
        %v1404 = vrot.slane %v1403, 4
        %v1405 = vadd.f32 %v1403, %v1404
        %v1406 = vrot.slane %v1405, 2
        %v1407 = vadd.f32 %v1405, %v1406
        %v1408 = vrot.slane %v1407, 1
        %v1409 = vadd.f32 %v1407, %v1408
        %v1410 = vadd.f32 %v1005, %v1007
        %v1411 = vrot.slane %v1410, 4
        %v1412 = vadd.f32 %v1410, %v1411
        %v1413 = vrot.slane %v1412, 2
        %v1414 = vadd.f32 %v1412, %v1413
        %v1415 = vrot.slane %v1414, 1
        %v1416 = vadd.f32 %v1414, %v1415
        %v1417 = vadd.f32 %v1006, %v1008
        %v1418 = vrot.slane %v1417, 4
        %v1419 = vadd.f32 %v1417, %v1418
        %v1420 = vrot.slane %v1419, 2
        %v1421 = vadd.f32 %v1419, %v1420
        %v1422 = vrot.slane %v1421, 1
        %v1423 = vadd.f32 %v1421, %v1422
        %v1424 = vmul.f32 %v1374, 0.11111111
        %v1425 = vmul.f32 %v1381, 0.11111111
        %v1426 = vmul.f32 %v1388, 0.11111111
        %v1427 = vmul.f32 %v1395, 0.11111111
        %v1428 = vmul.f32 %v1402, 0.11111111
        %v1429 = vmul.f32 %v1409, 0.11111111
        %v1430 = vmul.f32 %v1416, 0.11111111
        %v1431 = vmul.f32 %v1423, 0.11111111
        %s1432 = sld [smem:[#allocation2]]
        %v1433 = vstv %s1432
        %v1434 = vmul.f32 %v1433, %v1339
        %v1435 = vmul.f32 %v1433, %v1365
        %v1444 = vsel %vm1143, %v1426, %v1424
        %v1445 = vsel %vm1145, %v1428, %v1444
        %v1446 = vsel %vm1147, %v1430, %v1445
        %v1447 = vsel %vm1143, %v1427, %v1425
        %v1448 = vsel %vm1145, %v1429, %v1447
        %v1449 = vsel %vm1147, %v1431, %v1448
        %v1452 = vadd.f32 %v1434, %v1446
        %v1453 = vadd.f32 %v1435, %v1449
        %v1454 = vpack.c.bf16 %v1452, %v1452
        %v1455 = vpack.c.bf16 %v1453, %v1453
        %v1456 = vld [vmem:[#allocation7] sm:$0xf]
        %v1457 = vld [vmem:[#allocation7 + $0x4] sm:$0xf]
        %v1458 = vld [vmem:[#allocation7 + $0x8] sm:$0xf]
        %v1459 = vld [vmem:[#allocation7 + $0xc] sm:$0xf]
        %v1460 = vld [vmem:[#allocation7 + $0x10] sm:$0xf]
        %v1461 = vld [vmem:[#allocation7 + $0x14] sm:$0xf]
        %v1462 = vld [vmem:[#allocation7 + $0x18] sm:$0xf]
        %v1463 = vld [vmem:[#allocation7 + $0x1c] sm:$0xf]
        %v1464 = vld [vmem:[#allocation7 + $0x20] sm:$0xf]
        %v1465 = vld [vmem:[#allocation7 + $0x24] sm:$0xf]
        %v1466 = vld [vmem:[#allocation7 + $0x28] sm:$0xf]
        %v1467 = vld [vmem:[#allocation7 + $0x2c] sm:$0xf]
        %v1468 = vld [vmem:[#allocation7 + $0x30] sm:$0xf]
        %v1469 = vld [vmem:[#allocation7 + $0x34] sm:$0xf]
        %v1470 = vld [vmem:[#allocation7 + $0x38] sm:$0xf]
        %v1471 = vld [vmem:[#allocation7 + $0x3c] sm:$0xf]
        %v1472 = vld [vmem:[#allocation7 + $0x40] sm:$0xf]
        %v1473 = vld [vmem:[#allocation7 + $0x44] sm:$0xf]
        %v1474 = vld [vmem:[#allocation7 + $0x48] sm:$0xf]
        %v1475 = vld [vmem:[#allocation7 + $0x4c] sm:$0xf]
        %v1476 = vld [vmem:[#allocation7 + $0x50] sm:$0xf]
        %v1477 = vld [vmem:[#allocation7 + $0x54] sm:$0xf]
        %v1478 = vld [vmem:[#allocation7 + $0x58] sm:$0xf]
        %v1479 = vld [vmem:[#allocation7 + $0x5c] sm:$0xf]
        %v1480 = vld [vmem:[#allocation7 + $0x60] sm:$0xf]
        %v1481 = vld [vmem:[#allocation7 + $0x64] sm:$0xf]
        %v1482 = vld [vmem:[#allocation7 + $0x68] sm:$0xf]
        %v1483 = vld [vmem:[#allocation7 + $0x6c] sm:$0xf]
        %v1484 = vld [vmem:[#allocation7 + $0x70] sm:$0xf]
        %v1485 = vld [vmem:[#allocation7 + $0x74] sm:$0xf]
        %v1486 = vld [vmem:[#allocation7 + $0x78] sm:$0xf]
        %v1487 = vld [vmem:[#allocation7 + $0x7c] sm:$0xf]
        %v1488 = vld [vmem:[%s7] sm:$0x1]
        %v1490 = vperm.slane %v1488, 0
        %v1524 = vunpack.c.l.b16 %v1456
        %v1525 = vunpack.c.l.b16 %v1457
        %v1526 = vunpack.c.l.b16 %v1458
        %v1527 = vunpack.c.l.b16 %v1459
        %v1528 = vunpack.c.l.b16 %v1460
        %v1529 = vunpack.c.l.b16 %v1461
        %v1530 = vunpack.c.l.b16 %v1462
        %v1531 = vunpack.c.l.b16 %v1463
        %v1532 = vunpack.c.l.b16 %v1464
        %v1533 = vunpack.c.l.b16 %v1465
        %v1534 = vunpack.c.l.b16 %v1466
        %v1535 = vunpack.c.l.b16 %v1467
        %v1536 = vunpack.c.l.b16 %v1468
        %v1537 = vunpack.c.l.b16 %v1469
        %v1538 = vunpack.c.l.b16 %v1470
        %v1539 = vunpack.c.l.b16 %v1471
        %v1540 = vunpack.c.l.b16 %v1472
        %v1541 = vunpack.c.l.b16 %v1473
        %v1542 = vunpack.c.l.b16 %v1474
        %v1543 = vunpack.c.l.b16 %v1475
        %v1544 = vunpack.c.l.b16 %v1476
        %v1545 = vunpack.c.l.b16 %v1477
        %v1546 = vunpack.c.l.b16 %v1478
        %v1547 = vunpack.c.l.b16 %v1479
        %v1548 = vunpack.c.l.b16 %v1480
        %v1549 = vunpack.c.l.b16 %v1481
        %v1550 = vunpack.c.l.b16 %v1482
        %v1551 = vunpack.c.l.b16 %v1483
        %v1552 = vunpack.c.l.b16 %v1484
        %v1553 = vunpack.c.l.b16 %v1485
        %v1554 = vunpack.c.l.b16 %v1486
        %v1555 = vunpack.c.l.b16 %v1487
        %v1556 = vpack.c.b16 %v1525, %v1524
        %v1557 = vpack.c.b16 %v1527, %v1526
        %v1558 = vpack.c.b16 %v1529, %v1528
        %v1559 = vpack.c.b16 %v1531, %v1530
        %v1560 = vpack.c.b16 %v1533, %v1532
        %v1561 = vpack.c.b16 %v1535, %v1534
        %v1562 = vpack.c.b16 %v1537, %v1536
        %v1563 = vpack.c.b16 %v1539, %v1538
        %v1564 = vpack.c.b16 %v1541, %v1540
        %v1565 = vpack.c.b16 %v1543, %v1542
        %v1566 = vpack.c.b16 %v1545, %v1544
        %v1567 = vpack.c.b16 %v1547, %v1546
        %v1568 = vpack.c.b16 %v1549, %v1548
        %v1569 = vpack.c.b16 %v1551, %v1550
        %v1570 = vpack.c.b16 %v1553, %v1552
        %v1571 = vpack.c.b16 %v1555, %v1554
        %1588 = vmatpush.bf16.msra.mxu0 %v1563
        %1589 = vmatpush.bf16.msra.mxu0 %v1562
        %1590 = vmatpush.bf16.msra.mxu0 %v1561
        %1591 = vmatpush.bf16.msra.mxu0 %v1560
        %1592 = vmatpush.bf16.msra.mxu0 %v1559
        %1593 = vmatpush.bf16.msra.mxu0 %v1558
        %1594 = vmatpush.bf16.msra.mxu0 %v1557
        %1595 = vmatpush.bf16.msra.mxu0 %v1556
        %1596 = vmatmul.bf16.gmra.mxu0 %v1454
        %v1597 = vpop.f32.mrf.mxu0
        %v1598 = vadd.f32 %v1490, %v1597
        %v1599 = vpop.f32.mrf.mxu0
        %1600 = vdwg.mxu0
        %1601 = vmatpush.bf16.msra.mxu0 %v1571
        %1602 = vmatpush.bf16.msra.mxu0 %v1570
        %1603 = vmatpush.bf16.msra.mxu0 %v1569
        %1604 = vmatpush.bf16.msra.mxu0 %v1568
        %1605 = vmatpush.bf16.msra.mxu0 %v1567
        %1606 = vmatpush.bf16.msra.mxu0 %v1566
        %1607 = vmatpush.bf16.msra.mxu0 %v1565
        %1608 = vmatpush.bf16.msra.mxu0 %v1564
        %1609 = vmatmul.bf16.gmra.mxu0 %v1455
        %v1610 = vpop.f32.mrf.mxu0
        %v1611 = vadd.f32 %v1598, %v1610
        %v1612 = vpop.f32.mrf.mxu0
        %1613 = vdwg.mxu0
        %v1614 = vmax.f32 %v1611, 0.0
        %v1615 = vpack.c.bf16 %v1614, %v1614
        %v1616 = vld [vmem:[%s8] sm:$0xf]
        %v1617 = vld [vmem:[%s8 + $0x4] sm:$0xf]
        %v1618 = vld [vmem:[%s8 + $0x8] sm:$0xf]
        %v1619 = vld [vmem:[%s8 + $0xc] sm:$0xf]
        %v1620 = vld [vmem:[%s8 + $0x10] sm:$0xf]
        %v1621 = vld [vmem:[%s8 + $0x14] sm:$0xf]
        %v1622 = vld [vmem:[%s8 + $0x18] sm:$0xf]
        %v1623 = vld [vmem:[%s8 + $0x1c] sm:$0xf]
        %v1624 = vld [vmem:[%s8 + $0x20] sm:$0xf]
        %v1625 = vld [vmem:[%s8 + $0x24] sm:$0xf]
        %v1626 = vld [vmem:[%s8 + $0x28] sm:$0xf]
        %v1627 = vld [vmem:[%s8 + $0x2c] sm:$0xf]
        %v1628 = vld [vmem:[%s8 + $0x30] sm:$0xf]
        %v1629 = vld [vmem:[%s8 + $0x34] sm:$0xf]
        %v1630 = vld [vmem:[%s8 + $0x38] sm:$0xf]
        %v1631 = vld [vmem:[%s8 + $0x3c] sm:$0xf]
        %v1632 = vld [vmem:[#allocation3] sm:$0x1]
        %v1634 = vperm.slane %v1632, 0
        %v1652 = vunpack.c.l.b16 %v1616
        %v1653 = vunpack.c.l.b16 %v1617
        %v1654 = vunpack.c.l.b16 %v1618
        %v1655 = vunpack.c.l.b16 %v1619
        %v1656 = vunpack.c.l.b16 %v1620
        %v1657 = vunpack.c.l.b16 %v1621
        %v1658 = vunpack.c.l.b16 %v1622
        %v1659 = vunpack.c.l.b16 %v1623
        %v1660 = vunpack.c.l.b16 %v1624
        %v1661 = vunpack.c.l.b16 %v1625
        %v1662 = vunpack.c.l.b16 %v1626
        %v1663 = vunpack.c.l.b16 %v1627
        %v1664 = vunpack.c.l.b16 %v1628
        %v1665 = vunpack.c.l.b16 %v1629
        %v1666 = vunpack.c.l.b16 %v1630
        %v1667 = vunpack.c.l.b16 %v1631
        %v1668 = vpack.c.b16 %v1653, %v1652
        %v1669 = vpack.c.b16 %v1655, %v1654
        %v1670 = vpack.c.b16 %v1657, %v1656
        %v1671 = vpack.c.b16 %v1659, %v1658
        %v1672 = vpack.c.b16 %v1661, %v1660
        %v1673 = vpack.c.b16 %v1663, %v1662
        %v1674 = vpack.c.b16 %v1665, %v1664
        %v1675 = vpack.c.b16 %v1667, %v1666
        %1684 = vmatpush.bf16.msra.mxu0 %v1675
        %1685 = vmatpush.bf16.msra.mxu0 %v1674
        %1686 = vmatpush.bf16.msra.mxu0 %v1673
        %1687 = vmatpush.bf16.msra.mxu0 %v1672
        %1688 = vmatpush.bf16.msra.mxu0 %v1671
        %1689 = vmatpush.bf16.msra.mxu0 %v1670
        %1690 = vmatpush.bf16.msra.mxu0 %v1669
        %1691 = vmatpush.bf16.msra.mxu0 %v1668
        %1692 = vmatmul.bf16.gmra.mxu0 %v1615
        %v1693 = vpop.f32.mrf.mxu0
        %v1694 = vadd.f32 %v1634, %v1693
        %v1695 = vpop.f32.mrf.mxu0
        %1696 = vdwg.mxu0
        %v1697 = vxor.u32 %v1694, 2147483648
        %v1698 = vmul.f32 %v1697, 1.442695
        %v1699 = vpow.pop %v1698
        %v1700 = vadd.f32 %v1699, 1.0
        %v1701 = vrcp.pop %v1700
        %v1702 = vmul.f32 %v1700, %v1701
        %v1703 = vsub.f32 1.0, %v1702
        %v1704 = vmul.f32 %v1701, %v1703
        %v1705 = vadd.f32 %v1701, %v1704
        %vm1706 = vweird.f32 %v1700
        %vm1707 = vweird.f32 %v1701
        %vm1708 = vmor %vm1706, %vm1707
        %v1709 = vsel %vm1708, %v1701, %v1705
        %v1710 = vand.u32 2147483647, %v1700
        %vm1711 = vcmp.eq.f32.partialorder %v1710, 8.507059e+37
        %v1712 = vand.u32 %v1700, 2147483648
        %v1713 = vor.u32 1.1754944e-38, %v1712
        %v1714 = vsel %vm1711, %v1713, %v1709
        %v1715 = vmul.f32 1.0, %v1714
        %1717 = vset.pattern.permute.xlu0 0
        %1718 = vperm.xlu0 %1717, %v1715
        %v1719 = vpop.permute.xlu0 %1718
        %v1720 = vperm.slane %v1719, %v787
        %vm1722 = vcmask 24576
        %1723 = vst.msk [vmem:[%s391] sm:$0x1] %vm1722, %v1720
        %s1724 = sand.u32 %s252, 1
        %s1725 = scalar_lea.sflag [#allocation6], %s1724
        %s1726 = sand.u32 %s252, 1
        %s1727 = scalar_lea.vmem [#allocation9], %s1726
        // Predicated region
        $region69: #{tpu_custom_call.1} parent=59 // pred_check
          %p1728 = pneg %p262
        $region70: #{tpu_custom_call.1} parent=59 // pred_check_branch
          %1730 = sbr.rel (%p1728) target = $region72
        $region71: #{tpu_custom_call.1} parent=59 // pred_region
          %1732 = vsyncadd %s1725, 0
          %s1733 = scalar_lea.hbm %s10, %s29
          %s1735 = sshll.u32 %s1727, 4
          %s1736 = int_to_ptr.vmem [resolvable:$true] %s1735
          %s1737 = sshll.u32 %s1733, 4
          %s1738 = int_to_ptr.hbm [resolvable:$true] %s1737
          %1740 = dma.vmem_to_hbm [thread:$0]  %s1736, 16, %s1738, %s1725
        $region72: #{tpu_custom_call.1} parent=59 // pred_fallthru
          _
      $region60: #{tpu_custom_call.1} parent=5 // pred_fallthru
        _
      %p1741 = scmp.le.s32.totalorder 2, %s24
      // Predicated region
      $region73: #{tpu_custom_call.1} parent=5 // pred_check
        %p1742 = pneg %p1741
      $region74: #{tpu_custom_call.1} parent=5 // pred_check_branch
        %1744 = sbr.rel (%p1742) target = $region76
      $region75: #{tpu_custom_call.1} parent=5 // pred_region
        %s1745 = ssub.s32 %s24, 2
        // Predicated region
        $region77: #{tpu_custom_call.1} parent=75 // pred_check
          %p1746 = pneg %p268
        $region78: #{tpu_custom_call.1} parent=75 // pred_check_branch
          %1748 = sbr.rel (%p1746) target = $region80
        $region79: #{tpu_custom_call.1} parent=75 // pred_region
          %s1749 = sand.u32 %s253, 1
          %s1750 = scalar_lea.sflag [#allocation6], %s1749
          %s1751 = sand.u32 %s253, 1
          %s1752 = scalar_lea.vmem [#allocation9], %s1751
          %1754 = dma.done %s1750, 16
        $region80: #{tpu_custom_call.1} parent=75 // pred_fallthru
          _
      $region76: #{tpu_custom_call.1} parent=5 // pred_fallthru
        _
    $region6: #{tpu_custom_call.1} parent=1 // loop_footer
      %s28 = sadd.s32 1, %s24
    $region7: #{tpu_custom_call.1} parent=1 // loop_footer_branch
      %23 = sbr.rel target = $region3
    $region8: #{tpu_custom_call.1} parent=1 // loop_exit
      _
    %1755 = vsyncpa [#allocation5], 1
    %s1756 = scalar_lea.sflag [#allocation5], 1
    %1757 = vsyncpa %s1756, 1
    %1758 = vsyncpa [#allocation8], 1
    %1759 = vsyncpa [#allocation6], 1
    %s1760 = scalar_lea.sflag [#allocation6], 1
    %1761 = vsyncpa %s1760, 1

</llo_original>
